<compile_context>
chip_gen: v5e
topology: v5e:2x2
jax: 0.10.0
libtpu: 0.0.40
codegen_flags: <defaults>
</compile_context>

<pallas_src>
import functools

import jax
import jax.numpy as jnp
from jax.experimental import pallas as pl
from jax.experimental.pallas import tpu as pltpu

NEG_BIG = -1e30   # stand-in for -inf that stays NaN-free on the VPU
MASK_BIG = 1e30

LANE = 128
TM = 64           # destination-node tile (sublane axis of adj / out)
TK = 128          # source-node tile (lane axis of adj)
HP = 8            # padded head axis (sublane-friendly for the score transpose)


def _round_up(n, m):
    return ((n + m - 1) // m) * m


def _pad2d(a, rows, cols, dtype):
    out = jnp.zeros((rows, cols), dtype)
    return out.at[: a.shape[0], : a.shape[1]].set(a.astype(dtype))


# ----------------------------- Pallas kernel ------------------------------- #

def gat_layer_kernel(x_src_ref, x_dst_ref, w_ref, att_src_ref, att_dst_ref,
                     scale_ref, shift_ref, adj_ref, out_ref,
                     a_d_sc, m_sc, l_sc, acc_sc, *, heads, out_dim, apply_elu):
    """One GATConv layer, tiled over (dst tiles, src tiles) with online softmax.

    x_src_ref : [TK, F_in_p] bf16      x_dst_ref : [TM, F_in_p] bf16
    w_ref     : [F_in_p, F_out_p] bf16 att_*_ref : [F_out_p, HP] f32 (block-diagonal)
    scale_ref : [1, F_out_p] f32       shift_ref : [1, F_out_p] f32 (bias [+ fused BN])
    adj_ref   : [TM, TK] bf16 (1 = edge j->i)      out_ref : [TM, F_out_p] f32
    scratch   : a_d [TM,HP], m [TM,HP], l [TM,HP], acc [TM,F_out_p]  (f32)
    """
    k = pl.program_id(1)
    nk = pl.num_programs(1)
    tm, f_pad = acc_sc.shape
    hp = m_sc.shape[1]
    pad_cols = f_pad - heads * out_dim
    pad_heads = hp - heads

    @pl.when(k == 0)
    def _init():
        # dst-side projection + per-head dst attention scores (only n_dst rows, once per dst tile)
        h_dst = jnp.dot(x_dst_ref[...], w_ref[...],
                        preferred_element_type=jnp.float32)              # [TM, F_out_p]
        a_d_sc[...] = jnp.dot(h_dst, att_dst_ref[...],
                              preferred_element_type=jnp.float32)        # [TM, HP]
        m_sc[...] = jnp.full_like(m_sc, NEG_BIG)
        l_sc[...] = jnp.zeros_like(l_sc)
        acc_sc[...] = jnp.zeros_like(acc_sc)

    # src-tile projection + per-head src attention scores (both on the MXU)
    h_src = jnp.dot(x_src_ref[...], w_ref[...],
                    preferred_element_type=jnp.float32)                  # [TK, F_out_p]
    a_s_t = jnp.transpose(
        jnp.dot(h_src, att_src_ref[...], preferred_element_type=jnp.float32))  # [HP, TK]
    h_src_bf = h_src.astype(jnp.bfloat16)

    adj = adj_ref[...].astype(jnp.float32)                               # [TM, TK]
    neg_mask = (adj - 1.0) * MASK_BIG                                    # 0 on edges, -1e30 off

    a_d = a_d_sc[...]
    m_prev = m_sc[...]
    l_prev = l_sc[...]
    acc_prev = acc_sc[...]

    m_cols, l_cols, corr_cols, contrib_cols = [], [], [], []
    for h in range(heads):
        e = a_d[:, h:h + 1] + a_s_t[h:h + 1, :]                          # [TM, TK]
        e = jnp.where(e > 0, e, 0.2 * e)                                 # LeakyReLU(0.2)
        e = e + neg_mask                                                 # mask non-edges
        m_h = jnp.maximum(m_prev[:, h:h + 1], jnp.max(e, axis=-1, keepdims=True))
        corr = jnp.exp(m_prev[:, h:h + 1] - m_h)
        p = jnp.exp(e - m_h) * adj
        l_h = corr * l_prev[:, h:h + 1] + jnp.sum(p, axis=-1, keepdims=True)
        contrib = jnp.dot(p.astype(jnp.bfloat16),
                          h_src_bf[:, h * out_dim:(h + 1) * out_dim],
                          preferred_element_type=jnp.float32)            # [TM, D]
        m_cols.append(m_h)
        l_cols.append(l_h)
        corr_cols.append(jnp.broadcast_to(corr, (tm, out_dim)))
        contrib_cols.append(contrib)

    if pad_heads > 0:
        m_cols.append(jnp.full((tm, pad_heads), NEG_BIG, jnp.float32))
        l_cols.append(jnp.zeros((tm, pad_heads), jnp.float32))
    if pad_cols > 0:
        corr_cols.append(jnp.ones((tm, pad_cols), jnp.float32))
        contrib_cols.append(jnp.zeros((tm, pad_cols), jnp.float32))

    # full-width (lane-dense) scratch updates
    m_sc[...] = jnp.concatenate(m_cols, axis=-1)
    l_sc[...] = jnp.concatenate(l_cols, axis=-1)
    acc_sc[...] = (jnp.concatenate(corr_cols, axis=-1) * acc_prev
                   + jnp.concatenate(contrib_cols, axis=-1))

    @pl.when(k == nk - 1)
    def _finalize():
        l = l_sc[...]
        inv = pl.reciprocal(jnp.where(l > 0.0, l, 1.0), approx=True)     # [TM, HP]
        inv_cols = [jnp.broadcast_to(inv[:, h:h + 1], (tm, out_dim))
                    for h in range(heads)]
        if pad_cols > 0:
            inv_cols.append(jnp.ones((tm, pad_cols), jnp.float32))
        y = acc_sc[...] * jnp.concatenate(inv_cols, axis=-1)
        y = y * scale_ref[...] + shift_ref[...]                          # bias (+ fused eval-BN)
        if apply_elu:
            y = jnp.where(y > 0.0, y, jnp.exp(y) - 1.0)                  # ELU(alpha=1)
        out_ref[...] = y                                                 # lane-dense store


# ------------------------------- wrappers ---------------------------------- #

def gat_layer(x_src, x_dst, adj, p, bn=None, apply_elu=False, tm=TM, tk=TK):
    heads, out_dim = p["heads"], p["out_dim"]
    w, att_src, att_dst, bias = p["w"], p["att_src"], p["att_dst"], p["bias"]

    n_src, f_in = x_src.shape
    n_dst = x_dst.shape[0]
    f_out = heads * out_dim

    f_in_p = _round_up(f_in, LANE)
    f_out_p = _round_up(f_out, LANE)
    n_src_p = _round_up(n_src, tk)
    n_dst_p = _round_up(n_dst, tm)

    # lane-dense padded operands; features/weights/adj in bf16 to halve DMA bytes
    x_src_p = _pad2d(x_src, n_src_p, f_in_p, jnp.bfloat16)
    x_dst_p = _pad2d(x_dst, n_dst_p, f_in_p, jnp.bfloat16)
    w_p = _pad2d(w, f_in_p, f_out_p, jnp.bfloat16)
    adj_p = _pad2d(adj, n_dst_p, n_src_p, jnp.bfloat16)

    # block-diagonal attention matrices: column h holds att[h] over rows h*D:(h+1)*D
    att_src_bd = jnp.zeros((f_out_p, HP), jnp.float32)
    att_dst_bd = jnp.zeros((f_out_p, HP), jnp.float32)
    for h in range(heads):
        att_src_bd = att_src_bd.at[h * out_dim:(h + 1) * out_dim, h].set(att_src[h])
        att_dst_bd = att_dst_bd.at[h * out_dim:(h + 1) * out_dim, h].set(att_dst[h])

    # fused affine epilogue: y = agg * scale + shift  (bias folded in; BN fused when given)
    if bn is not None:
        s = bn["gamma"] * jax.lax.rsqrt(bn["var"] + 1e-5)
        sh = (bias - bn["mean"]) * s + bn["beta"]
    else:
        s = jnp.ones_like(bias)
        sh = bias
    scale_p = _pad2d(s[None, :], 1, f_out_p, jnp.float32)
    shift_p = _pad2d(sh[None, :], 1, f_out_p, jnp.float32)

    grid = (n_dst_p // tm, n_src_p // tk)

    kernel = functools.partial(gat_layer_kernel, heads=heads, out_dim=out_dim,
                               apply_elu=apply_elu)

    cost = pl.CostEstimate(
        flops=int(2 * (grid[0] * n_src_p + n_dst_p) * f_in_p * f_out_p
                  + 2 * heads * n_dst_p * n_src_p * (out_dim + 2)),
        transcendentals=int(heads * n_dst_p * n_src_p),
        bytes_accessed=int(2 * (adj_p.size + x_src_p.size + x_dst_p.size + w_p.size)
                           + 4 * n_dst_p * f_out_p),
    )

    out = pl.pallas_call(
        kernel,
        out_shape=jax.ShapeDtypeStruct((n_dst_p, f_out_p), jnp.float32),
        grid_spec=pltpu.PrefetchScalarGridSpec(
            num_scalar_prefetch=0,
            grid=grid,
            in_specs=[
                pl.BlockSpec((tk, f_in_p), lambda i, k: (k, 0)),        # x_src tile
                pl.BlockSpec((tm, f_in_p), lambda i, k: (i, 0)),        # x_dst tile
                pl.BlockSpec((f_in_p, f_out_p), lambda i, k: (0, 0)),   # W
                pl.BlockSpec((f_out_p, HP), lambda i, k: (0, 0)),       # att_src (block-diag)
                pl.BlockSpec((f_out_p, HP), lambda i, k: (0, 0)),       # att_dst (block-diag)
                pl.BlockSpec((1, f_out_p), lambda i, k: (0, 0)),        # scale
                pl.BlockSpec((1, f_out_p), lambda i, k: (0, 0)),        # shift
                pl.BlockSpec((tm, tk), lambda i, k: (i, k)),            # adj tile
            ],
            out_specs=pl.BlockSpec((tm, f_out_p), lambda i, k: (i, 0)),
            scratch_shapes=[
                pltpu.VMEM((tm, HP), jnp.float32),       # a_dst scores
                pltpu.VMEM((tm, HP), jnp.float32),       # running max
                pltpu.VMEM((tm, HP), jnp.float32),       # running denom
                pltpu.VMEM((tm, f_out_p), jnp.float32),  # running weighted sum
            ],
        ),
        compiler_params=pltpu.CompilerParams(
            dimension_semantics=("parallel", "arbitrary"),
            vmem_limit_bytes=32 * 1024 * 1024,
        ),
        cost_estimate=cost,
    )(x_src_p, x_dst_p, w_p, att_src_bd, att_dst_bd, scale_p, shift_p, adj_p)

    return out[:n_dst, :f_out]


def gat_forward(x, adjs, params):
    """Mirrors GAT.forward: adjs is a list of (dense_adj_mask, (n_src, n_dst))."""
    for i, (adj, size) in enumerate(adjs):
        x_target = x[: size[1]]            # PyG neighbor-sampler: dst nodes are the prefix
        p = params[f"gat{i + 1}"]
        if i == 0:
            # GATConv + BatchNorm1d(eval) + ELU fused into one kernel; dropout(eval)=identity
            x = gat_layer(x, x_target, adj, p, bn=params["norm"], apply_elu=True)
        else:
            x = gat_layer(x, x_target, adj, p, bn=None, apply_elu=False)
    return x


# --------------------------------- main ------------------------------------ #

if __name__ == "__main__":
    # in_dim=8, hid_dim=8, heads=2, out_dim=4; sampled node counts per hop: 200 -> 96 -> 32
    in_dim, hid_dim, out_dim, heads = 8, 8, 4, 2
    n0, n1, n2 = 200, 96, 32

    ks = jax.random.split(jax.random.PRNGKey(0), 15)

    params = {
        "gat1": {
            "w": 0.1 * jax.random.normal(ks[0], (in_dim, heads * hid_dim), jnp.float32),
            "att_src": 0.1 * jax.random.normal(ks[1], (heads, hid_dim), jnp.float32),
            "att_dst": 0.1 * jax.random.normal(ks[2], (heads, hid_dim), jnp.float32),
            "bias": 0.1 * jax.random.normal(ks[3], (heads * hid_dim,), jnp.float32),
            "heads": heads, "out_dim": hid_dim,
        },
        "gat2": {
            "w": 0.1 * jax.random.normal(ks[4], (heads * hid_dim, out_dim), jnp.float32),
            "att_src": 0.1 * jax.random.normal(ks[5], (1, out_dim), jnp.float32),
            "att_dst": 0.1 * jax.random.normal(ks[6], (1, out_dim), jnp.float32),
            "bias": 0.1 * jax.random.normal(ks[7], (out_dim,), jnp.float32),
            "heads": 1, "out_dim": out_dim,
        },
        "norm": {
            "gamma": 1.0 + 0.1 * jax.random.normal(ks[8], (heads * hid_dim,), jnp.float32),
            "beta": 0.1 * jax.random.normal(ks[9], (heads * hid_dim,), jnp.float32),
            "mean": 0.1 * jax.random.normal(ks[10], (heads * hid_dim,), jnp.float32),
            "var": 0.5 + jnp.abs(0.1 * jax.random.normal(ks[11], (heads * hid_dim,), jnp.float32)),
        },
    }

    # input features + synthetic dense adjacency masks (adj[i, j] = 1 iff edge j -> i)
    x = jax.random.normal(ks[12], (n0, in_dim), jnp.float32)
    adj1 = (jax.random.uniform(ks[13], (n1, n0)) < 0.15).astype(jnp.float32)
    adj1 = adj1.at[:, 0].set(1.0)   # every target node has >=1 incoming edge
    adj2 = (jax.random.uniform(ks[14], (n2, n1)) < 0.25).astype(jnp.float32)
    adj2 = adj2.at[:, 0].set(1.0)

    adjs = [(adj1, (n0, n1)), (adj2, (n1, n2))]

    out = gat_forward(x, adjs, params)
    out = jax.block_until_ready(out)
    assert out.shape == (n2, out_dim), out.shape
    assert bool(jnp.all(jnp.isfinite(out)))
    print("KERNEL_OK")
</pallas_src>

<mosaic_0001>
module attributes {stable_mosaic.version = 11 : i64} {
  func.func @gat_layer_kernel(%arg0: i32, %arg1: i32, %arg2: memref<128x128xbf16, #tpu.memory_space<vmem>>, %arg3: memref<64x128xbf16, #tpu.memory_space<vmem>>, %arg4: memref<128x128xbf16, #tpu.memory_space<vmem>>, %arg5: memref<128x8xf32, #tpu.memory_space<vmem>>, %arg6: memref<128x8xf32, #tpu.memory_space<vmem>>, %arg7: memref<1x128xf32, #tpu.memory_space<vmem>>, %arg8: memref<1x128xf32, #tpu.memory_space<vmem>>, %arg9: memref<64x128xbf16, #tpu.memory_space<vmem>>, %arg10: memref<64x128xf32, #tpu.memory_space<vmem>>, %arg11: memref<64x8xf32, #tpu.memory_space<vmem>>, %arg12: memref<64x8xf32, #tpu.memory_space<vmem>>, %arg13: memref<64x8xf32, #tpu.memory_space<vmem>>, %arg14: memref<64x128xf32, #tpu.memory_space<vmem>>) attributes {dimension_semantics = [#tpu.dimension_semantics<parallel>, #tpu.dimension_semantics<arbitrary>], iteration_bounds = array<i64: 2, 2>, scalar_prefetch = 0 : i64, scratch_operands = 4 : i64, tpu.core_type = #tpu.core_type<tc>, window_params = [{transform_indices = @transform_0, window_bounds = array<i64: 128, 128>}, {transform_indices = @transform_1, window_bounds = array<i64: 64, 128>}, {pipeline_mode = #tpu.pipeline_mode<synchronous>, transform_indices = @transform_2, window_bounds = array<i64: 128, 128>}, {pipeline_mode = #tpu.pipeline_mode<synchronous>, transform_indices = @transform_3, window_bounds = array<i64: 128, 8>}, {pipeline_mode = #tpu.pipeline_mode<synchronous>, transform_indices = @transform_4, window_bounds = array<i64: 128, 8>}, {pipeline_mode = #tpu.pipeline_mode<synchronous>, transform_indices = @transform_5, window_bounds = array<i64: 1, 128>}, {pipeline_mode = #tpu.pipeline_mode<synchronous>, transform_indices = @transform_6, window_bounds = array<i64: 1, 128>}, {transform_indices = @transform_7, window_bounds = array<i64: 64, 128>}, {transform_indices = @transform_8, window_bounds = array<i64: 64, 128>}]} {
    %c0_i32 = arith.constant 0 : i32
    %0 = arith.cmpi eq, %arg1, %c0_i32 : i32
    %1 = arith.extui %0 : i1 to i32
    %c0_i32_0 = arith.constant 0 : i32
    %2 = arith.cmpi ne, %1, %c0_i32_0 : i32
    scf.if %2 {
      %c0_40 = arith.constant 0 : index
      %c0_41 = arith.constant 0 : index
      %100 = vector.load %arg3[%c0_40, %c0_41] : memref<64x128xbf16, #tpu.memory_space<vmem>>, vector<64x128xbf16>
      %c0_42 = arith.constant 0 : index
      %c0_43 = arith.constant 0 : index
      %101 = vector.load %arg4[%c0_42, %c0_43] : memref<128x128xbf16, #tpu.memory_space<vmem>>, vector<128x128xbf16>
      %cst_44 = arith.constant dense<0.000000e+00> : vector<64x128xf32>
      %102 = tpu.matmul %100, %101, %cst_44 {dimension_numbers = #tpu.dot_dimension_numbers<[1], [0], [0], [1], [0, 0, 1, 1], [], []>} : vector<64x128xbf16>, vector<128x128xbf16>, vector<64x128xf32> -> vector<64x128xf32>
      %c0_45 = arith.constant 0 : index
      %c0_46 = arith.constant 0 : index
      %103 = vector.load %arg6[%c0_45, %c0_46] : memref<128x8xf32, #tpu.memory_space<vmem>>, vector<128x8xf32>
      %cst_47 = arith.constant dense<0.000000e+00> : vector<64x8xf32>
      %104 = tpu.matmul %102, %103, %cst_47 {dimension_numbers = #tpu.dot_dimension_numbers<[1], [0], [0], [1], [0, 0, 1, 1], [], []>} : vector<64x128xf32>, vector<128x8xf32>, vector<64x8xf32> -> vector<64x8xf32>
      %c0_48 = arith.constant 0 : index
      %c0_49 = arith.constant 0 : index
      %105 = vector.load %arg11[%c0_48, %c0_49] : memref<64x8xf32, #tpu.memory_space<vmem>>, vector<64x8xf32>
      tpu.vector_store %arg11[%c0_48, %c0_49], %104 {strides = array<i32>} : memref<64x8xf32, #tpu.memory_space<vmem>>, vector<64x8xf32>,
      %cst_50 = arith.constant -1.000000e+30 : f32
      %106 = vector.broadcast %cst_50 : f32 to vector<64x8xf32>
      %c0_51 = arith.constant 0 : index
      %c0_52 = arith.constant 0 : index
      %107 = vector.load %arg12[%c0_51, %c0_52] : memref<64x8xf32, #tpu.memory_space<vmem>>, vector<64x8xf32>
      tpu.vector_store %arg12[%c0_51, %c0_52], %106 {strides = array<i32>} : memref<64x8xf32, #tpu.memory_space<vmem>>, vector<64x8xf32>,
      %cst_53 = arith.constant 0.000000e+00 : f32
      %108 = vector.broadcast %cst_53 : f32 to vector<64x8xf32>
      %c0_54 = arith.constant 0 : index
      %c0_55 = arith.constant 0 : index
      %109 = vector.load %arg13[%c0_54, %c0_55] : memref<64x8xf32, #tpu.memory_space<vmem>>, vector<64x8xf32>
      tpu.vector_store %arg13[%c0_54, %c0_55], %108 {strides = array<i32>} : memref<64x8xf32, #tpu.memory_space<vmem>>, vector<64x8xf32>,
      %cst_56 = arith.constant 0.000000e+00 : f32
      %110 = vector.broadcast %cst_56 : f32 to vector<64x128xf32>
      %c0_57 = arith.constant 0 : index
      %c0_58 = arith.constant 0 : index
      %111 = vector.load %arg14[%c0_57, %c0_58] : memref<64x128xf32, #tpu.memory_space<vmem>>, vector<64x128xf32>
      tpu.vector_store %arg14[%c0_57, %c0_58], %110 {strides = array<i32>} : memref<64x128xf32, #tpu.memory_space<vmem>>, vector<64x128xf32>,
    } else {
    }
    %c0 = arith.constant 0 : index
    %c0_1 = arith.constant 0 : index
    %3 = vector.load %arg2[%c0, %c0_1] : memref<128x128xbf16, #tpu.memory_space<vmem>>, vector<128x128xbf16>
    %c0_2 = arith.constant 0 : index
    %c0_3 = arith.constant 0 : index
    %4 = vector.load %arg4[%c0_2, %c0_3] : memref<128x128xbf16, #tpu.memory_space<vmem>>, vector<128x128xbf16>
    %cst = arith.constant dense<0.000000e+00> : vector<128x128xf32>
    %5 = tpu.matmul %3, %4, %cst {dimension_numbers = #tpu.dot_dimension_numbers<[1], [0], [0], [1], [0, 0, 1, 1], [], []>} : vector<128x128xbf16>, vector<128x128xbf16>, vector<128x128xf32> -> vector<128x128xf32>
    %c0_4 = arith.constant 0 : index
    %c0_5 = arith.constant 0 : index
    %6 = vector.load %arg5[%c0_4, %c0_5] : memref<128x8xf32, #tpu.memory_space<vmem>>, vector<128x8xf32>
    %cst_6 = arith.constant dense<0.000000e+00> : vector<128x8xf32>
    %7 = tpu.matmul %5, %6, %cst_6 {dimension_numbers = #tpu.dot_dimension_numbers<[1], [0], [0], [1], [0, 0, 1, 1], [], []>} : vector<128x128xf32>, vector<128x8xf32>, vector<128x8xf32> -> vector<128x8xf32>
    %8 = tpu.transpose %7, [1, 0] : vector<128x8xf32> -> vector<8x128xf32>
    %9 = arith.truncf %5 : vector<128x128xf32> to vector<128x128xbf16>
    %c0_7 = arith.constant 0 : index
    %c0_8 = arith.constant 0 : index
    %10 = vector.load %arg9[%c0_7, %c0_8] : memref<64x128xbf16, #tpu.memory_space<vmem>>, vector<64x128xbf16>
    %11 = arith.extf %10 : vector<64x128xbf16> to vector<64x128xf32>
    %cst_9 = arith.constant 1.000000e+00 : f32
    %12 = vector.broadcast %cst_9 : f32 to vector<64x128xf32>
    %13 = arith.subf %11, %12 : vector<64x128xf32>
    %cst_10 = arith.constant 1.000000e+30 : f32
    %14 = vector.broadcast %cst_10 : f32 to vector<64x128xf32>
    %15 = arith.mulf %13, %14 : vector<64x128xf32>
    %c0_11 = arith.constant 0 : index
    %c0_12 = arith.constant 0 : index
    %16 = vector.load %arg11[%c0_11, %c0_12] : memref<64x8xf32, #tpu.memory_space<vmem>>, vector<64x8xf32>
    %c0_13 = arith.constant 0 : index
    %c0_14 = arith.constant 0 : index
    %17 = vector.load %arg12[%c0_13, %c0_14] : memref<64x8xf32, #tpu.memory_space<vmem>>, vector<64x8xf32>
    %c0_15 = arith.constant 0 : index
    %c0_16 = arith.constant 0 : index
    %18 = vector.load %arg13[%c0_15, %c0_16] : memref<64x8xf32, #tpu.memory_space<vmem>>, vector<64x8xf32>
    %c0_17 = arith.constant 0 : index
    %c0_18 = arith.constant 0 : index
    %19 = vector.load %arg14[%c0_17, %c0_18] : memref<64x128xf32, #tpu.memory_space<vmem>>, vector<64x128xf32>
    %20 = vector.extract_strided_slice %16 {offsets = [0, 0], sizes = [64, 1], strides = [1, 1]} : vector<64x8xf32> to vector<64x1xf32>
    %21 = vector.extract_strided_slice %8 {offsets = [0, 0], sizes = [1, 128], strides = [1, 1]} : vector<8x128xf32> to vector<1x128xf32>
    %22 = vector.broadcast %20 : vector<64x1xf32> to vector<64x128xf32>
    %23 = vector.broadcast %21 : vector<1x128xf32> to vector<64x128xf32>
    %24 = arith.addf %22, %23 : vector<64x128xf32>
    %cst_19 = arith.constant 0.000000e+00 : f32
    %25 = vector.broadcast %cst_19 : f32 to vector<64x128xf32>
    %26 = arith.cmpf ogt, %24, %25 : vector<64x128xf32>
    %cst_20 = arith.constant 2.000000e-01 : f32
    %27 = vector.broadcast %cst_20 : f32 to vector<64x128xf32>
    %28 = arith.mulf %27, %24 : vector<64x128xf32>
    %29 = arith.select %26, %24, %28 : vector<64x128xi1>, vector<64x128xf32>
    %30 = arith.addf %29, %15 : vector<64x128xf32>
    %31 = vector.extract_strided_slice %17 {offsets = [0, 0], sizes = [64, 1], strides = [1, 1]} : vector<64x8xf32> to vector<64x1xf32>
    %cst_21 = arith.constant dense<0xFF800000> : vector<64xf32>
    %32 = vector.multi_reduction <maximumf>, %30, %cst_21 [1] : vector<64x128xf32> to vector<64xf32>
    %33 = vector.shape_cast %32 : vector<64xf32> to vector<64x1xf32>
    %34 = arith.maximumf %31, %33 : vector<64x1xf32>
    %35 = vector.extract_strided_slice %17 {offsets = [0, 0], sizes = [64, 1], strides = [1, 1]} : vector<64x8xf32> to vector<64x1xf32>
    %36 = arith.subf %35, %34 : vector<64x1xf32>
    %37 = math.exp %36 : vector<64x1xf32>
    %38 = vector.broadcast %34 : vector<64x1xf32> to vector<64x128xf32>
    %39 = arith.subf %30, %38 : vector<64x128xf32>
    %40 = math.exp %39 : vector<64x128xf32>
    %41 = arith.mulf %40, %11 : vector<64x128xf32>
    %42 = vector.extract_strided_slice %18 {offsets = [0, 0], sizes = [64, 1], strides = [1, 1]} : vector<64x8xf32> to vector<64x1xf32>
    %43 = arith.mulf %37, %42 : vector<64x1xf32>
    %cst_22 = arith.constant dense<0.000000e+00> : vector<64xf32>
    %44 = vector.multi_reduction <add>, %41, %cst_22 [1] : vector<64x128xf32> to vector<64xf32>
    %45 = vector.shape_cast %44 : vector<64xf32> to vector<64x1xf32>
    %46 = arith.addf %43, %45 : vector<64x1xf32>
    %47 = arith.truncf %41 : vector<64x128xf32> to vector<64x128xbf16>
    %48 = vector.extract_strided_slice %9 {offsets = [0, 0], sizes = [128, 8], strides = [1, 1]} : vector<128x128xbf16> to vector<128x8xbf16>
    %cst_23 = arith.constant dense<0.000000e+00> : vector<64x8xf32>
    %49 = tpu.matmul %47, %48, %cst_23 {dimension_numbers = #tpu.dot_dimension_numbers<[1], [0], [0], [1], [0, 0, 1, 1], [], []>} : vector<64x128xbf16>, vector<128x8xbf16>, vector<64x8xf32> -> vector<64x8xf32>
    %50 = vector.shape_cast %37 : vector<64x1xf32> to vector<64x1xf32>
    %51 = vector.broadcast %50 : vector<64x1xf32> to vector<64x8xf32>
    %52 = vector.extract_strided_slice %16 {offsets = [0, 1], sizes = [64, 1], strides = [1, 1]} : vector<64x8xf32> to vector<64x1xf32>
    %53 = vector.extract_strided_slice %8 {offsets = [1, 0], sizes = [1, 128], strides = [1, 1]} : vector<8x128xf32> to vector<1x128xf32>
    %54 = vector.broadcast %52 : vector<64x1xf32> to vector<64x128xf32>
    %55 = vector.broadcast %53 : vector<1x128xf32> to vector<64x128xf32>
    %56 = arith.addf %54, %55 : vector<64x128xf32>
    %cst_24 = arith.constant 0.000000e+00 : f32
    %57 = vector.broadcast %cst_24 : f32 to vector<64x128xf32>
    %58 = arith.cmpf ogt, %56, %57 : vector<64x128xf32>
    %cst_25 = arith.constant 2.000000e-01 : f32
    %59 = vector.broadcast %cst_25 : f32 to vector<64x128xf32>
    %60 = arith.mulf %59, %56 : vector<64x128xf32>
    %61 = arith.select %58, %56, %60 : vector<64x128xi1>, vector<64x128xf32>
    %62 = arith.addf %61, %15 : vector<64x128xf32>
    %63 = vector.extract_strided_slice %17 {offsets = [0, 1], sizes = [64, 1], strides = [1, 1]} : vector<64x8xf32> to vector<64x1xf32>
    %cst_26 = arith.constant dense<0xFF800000> : vector<64xf32>
    %64 = vector.multi_reduction <maximumf>, %62, %cst_26 [1] : vector<64x128xf32> to vector<64xf32>
    %65 = vector.shape_cast %64 : vector<64xf32> to vector<64x1xf32>
    %66 = arith.maximumf %63, %65 : vector<64x1xf32>
    %67 = vector.extract_strided_slice %17 {offsets = [0, 1], sizes = [64, 1], strides = [1, 1]} : vector<64x8xf32> to vector<64x1xf32>
    %68 = arith.subf %67, %66 : vector<64x1xf32>
    %69 = math.exp %68 : vector<64x1xf32>
    %70 = vector.broadcast %66 : vector<64x1xf32> to vector<64x128xf32>
    %71 = arith.subf %62, %70 : vector<64x128xf32>
    %72 = math.exp %71 : vector<64x128xf32>
    %73 = arith.mulf %72, %11 : vector<64x128xf32>
    %74 = vector.extract_strided_slice %18 {offsets = [0, 1], sizes = [64, 1], strides = [1, 1]} : vector<64x8xf32> to vector<64x1xf32>
    %75 = arith.mulf %69, %74 : vector<64x1xf32>
    %cst_27 = arith.constant dense<0.000000e+00> : vector<64xf32>
    %76 = vector.multi_reduction <add>, %73, %cst_27 [1] : vector<64x128xf32> to vector<64xf32>
    %77 = vector.shape_cast %76 : vector<64xf32> to vector<64x1xf32>
    %78 = arith.addf %75, %77 : vector<64x1xf32>
    %79 = arith.truncf %73 : vector<64x128xf32> to vector<64x128xbf16>
    %80 = vector.extract_strided_slice %9 {offsets = [0, 8], sizes = [128, 8], strides = [1, 1]} : vector<128x128xbf16> to vector<128x8xbf16>
    %cst_28 = arith.constant dense<0.000000e+00> : vector<64x8xf32>
    %81 = tpu.matmul %79, %80, %cst_28 {dimension_numbers = #tpu.dot_dimension_numbers<[1], [0], [0], [1], [0, 0, 1, 1], [], []>} : vector<64x128xbf16>, vector<128x8xbf16>, vector<64x8xf32> -> vector<64x8xf32>
    %82 = vector.shape_cast %69 : vector<64x1xf32> to vector<64x1xf32>
    %83 = vector.broadcast %82 : vector<64x1xf32> to vector<64x8xf32>
    %cst_29 = arith.constant -1.000000e+30 : f32
    %84 = vector.broadcast %cst_29 : f32 to vector<64x6xf32>
    %cst_30 = arith.constant 0.000000e+00 : f32
    %85 = vector.broadcast %cst_30 : f32 to vector<64x6xf32>
    %cst_31 = arith.constant 1.000000e+00 : f32
    %86 = vector.broadcast %cst_31 : f32 to vector<64x112xf32>
    %cst_32 = arith.constant 0.000000e+00 : f32
    %87 = vector.broadcast %cst_32 : f32 to vector<64x112xf32>
    %88 = tpu.concatenate %34, %66, %84 in 1 : vector<64x1xf32>, vector<64x1xf32>, vector<64x6xf32> -> vector<64x8xf32>
    %c0_33 = arith.constant 0 : index
    %c0_34 = arith.constant 0 : index
    %89 = vector.load %arg12[%c0_33, %c0_34] : memref<64x8xf32, #tpu.memory_space<vmem>>, vector<64x8xf32>
    tpu.vector_store %arg12[%c0_33, %c0_34], %88 {strides = array<i32>} : memref<64x8xf32, #tpu.memory_space<vmem>>, vector<64x8xf32>,
    %90 = tpu.concatenate %46, %78, %85 in 1 : vector<64x1xf32>, vector<64x1xf32>, vector<64x6xf32> -> vector<64x8xf32>
    %c0_35 = arith.constant 0 : index
    %c0_36 = arith.constant 0 : index
    %91 = vector.load %arg13[%c0_35, %c0_36] : memref<64x8xf32, #tpu.memory_space<vmem>>, vector<64x8xf32>
    tpu.vector_store %arg13[%c0_35, %c0_36], %90 {strides = array<i32>} : memref<64x8xf32, #tpu.memory_space<vmem>>, vector<64x8xf32>,
    %92 = tpu.concatenate %51, %83, %86 in 1 : vector<64x8xf32>, vector<64x8xf32>, vector<64x112xf32> -> vector<64x128xf32>
    %93 = arith.mulf %92, %19 : vector<64x128xf32>
    %94 = tpu.concatenate %49, %81, %87 in 1 : vector<64x8xf32>, vector<64x8xf32>, vector<64x112xf32> -> vector<64x128xf32>
    %95 = arith.addf %93, %94 : vector<64x128xf32>
    %c0_37 = arith.constant 0 : index
    %c0_38 = arith.constant 0 : index
    %96 = vector.load %arg14[%c0_37, %c0_38] : memref<64x128xf32, #tpu.memory_space<vmem>>, vector<64x128xf32>
    tpu.vector_store %arg14[%c0_37, %c0_38], %95 {strides = array<i32>} : memref<64x128xf32, #tpu.memory_space<vmem>>, vector<64x128xf32>,
    %c1_i32 = arith.constant 1 : i32
    %97 = arith.cmpi eq, %arg1, %c1_i32 : i32
    %98 = arith.extui %97 : i1 to i32
    %c0_i32_39 = arith.constant 0 : i32
    %99 = arith.cmpi ne, %98, %c0_i32_39 : i32
    scf.if %99 {
      %c0_40 = arith.constant 0 : index
      %c0_41 = arith.constant 0 : index
      %100 = vector.load %arg13[%c0_40, %c0_41] : memref<64x8xf32, #tpu.memory_space<vmem>>, vector<64x8xf32>
      %cst_42 = arith.constant 0.000000e+00 : f32
      %101 = vector.broadcast %cst_42 : f32 to vector<64x8xf32>
      %102 = arith.cmpf ogt, %100, %101 : vector<64x8xf32>
      %cst_43 = arith.constant 1.000000e+00 : f32
      %103 = vector.broadcast %cst_43 : f32 to vector<64x8xf32>
      %104 = arith.select %102, %100, %103 : vector<64x8xi1>, vector<64x8xf32>
      %105 = tpu.reciprocal %104 {approx = true} : vector<64x8xf32> -> vector<64x8xf32>
      %106 = vector.extract_strided_slice %105 {offsets = [0, 0], sizes = [64, 1], strides = [1, 1]} : vector<64x8xf32> to vector<64x1xf32>
      %107 = vector.shape_cast %106 : vector<64x1xf32> to vector<64x1xf32>
      %108 = vector.broadcast %107 : vector<64x1xf32> to vector<64x8xf32>
      %109 = vector.extract_strided_slice %105 {offsets = [0, 1], sizes = [64, 1], strides = [1, 1]} : vector<64x8xf32> to vector<64x1xf32>
      %110 = vector.shape_cast %109 : vector<64x1xf32> to vector<64x1xf32>
      %111 = vector.broadcast %110 : vector<64x1xf32> to vector<64x8xf32>
      %cst_44 = arith.constant 1.000000e+00 : f32
      %112 = vector.broadcast %cst_44 : f32 to vector<64x112xf32>
      %c0_45 = arith.constant 0 : index
      %c0_46 = arith.constant 0 : index
      %113 = vector.load %arg14[%c0_45, %c0_46] : memref<64x128xf32, #tpu.memory_space<vmem>>, vector<64x128xf32>
      %114 = tpu.concatenate %108, %111, %112 in 1 : vector<64x8xf32>, vector<64x8xf32>, vector<64x112xf32> -> vector<64x128xf32>
      %115 = arith.mulf %113, %114 : vector<64x128xf32>
      %c0_47 = arith.constant 0 : index
      %c0_48 = arith.constant 0 : index
      %116 = vector.load %arg7[%c0_47, %c0_48] : memref<1x128xf32, #tpu.memory_space<vmem>>, vector<1x128xf32>
      %117 = vector.broadcast %116 : vector<1x128xf32> to vector<64x128xf32>
      %118 = arith.mulf %115, %117 : vector<64x128xf32>
      %c0_49 = arith.constant 0 : index
      %c0_50 = arith.constant 0 : index
      %119 = vector.load %arg8[%c0_49, %c0_50] : memref<1x128xf32, #tpu.memory_space<vmem>>, vector<1x128xf32>
      %120 = vector.broadcast %119 : vector<1x128xf32> to vector<64x128xf32>
      %121 = arith.addf %118, %120 : vector<64x128xf32>
      %cst_51 = arith.constant 0.000000e+00 : f32
      %122 = vector.broadcast %cst_51 : f32 to vector<64x128xf32>
      %123 = arith.cmpf ogt, %121, %122 : vector<64x128xf32>
      %124 = math.exp %121 : vector<64x128xf32>
      %cst_52 = arith.constant 1.000000e+00 : f32
      %125 = vector.broadcast %cst_52 : f32 to vector<64x128xf32>
      %126 = arith.subf %124, %125 : vector<64x128xf32>
      %127 = arith.select %123, %121, %126 : vector<64x128xi1>, vector<64x128xf32>
      %c0_53 = arith.constant 0 : index
      %c0_54 = arith.constant 0 : index
      %128 = vector.load %arg10[%c0_53, %c0_54] : memref<64x128xf32, #tpu.memory_space<vmem>>, vector<64x128xf32>
      tpu.vector_store %arg10[%c0_53, %c0_54], %127 {strides = array<i32>} : memref<64x128xf32, #tpu.memory_space<vmem>>, vector<64x128xf32>,
    } else {
    }
    return
  }
  func.func @transform_0(%arg0: i32, %arg1: i32) -> (i32, i32) {
    %c0_i32 = arith.constant 0 : i32
    %c0_i32_0 = arith.constant 0 : i32
    return %arg1, %c0_i32 : i32, i32
  }
  func.func @transform_1(%arg0: i32, %arg1: i32) -> (i32, i32) {
    %c0_i32 = arith.constant 0 : i32
    %c0_i32_0 = arith.constant 0 : i32
    return %arg0, %c0_i32 : i32, i32
  }
  func.func @transform_2(%arg0: i32, %arg1: i32) -> (i32, i32) {
    %c0_i32 = arith.constant 0 : i32
    %c0_i32_0 = arith.constant 0 : i32
    %c0_i32_1 = arith.constant 0 : i32
    return %c0_i32, %c0_i32_0 : i32, i32
  }
  func.func @transform_3(%arg0: i32, %arg1: i32) -> (i32, i32) {
    %c0_i32 = arith.constant 0 : i32
    %c0_i32_0 = arith.constant 0 : i32
    %c0_i32_1 = arith.constant 0 : i32
    return %c0_i32, %c0_i32_0 : i32, i32
  }
  func.func @transform_4(%arg0: i32, %arg1: i32) -> (i32, i32) {
    %c0_i32 = arith.constant 0 : i32
    %c0_i32_0 = arith.constant 0 : i32
    %c0_i32_1 = arith.constant 0 : i32
    return %c0_i32, %c0_i32_0 : i32, i32
  }
  func.func @transform_5(%arg0: i32, %arg1: i32) -> (i32, i32) {
    %c0_i32 = arith.constant 0 : i32
    %c0_i32_0 = arith.constant 0 : i32
    %c0_i32_1 = arith.constant 0 : i32
    return %c0_i32, %c0_i32_0 : i32, i32
  }
  func.func @transform_6(%arg0: i32, %arg1: i32) -> (i32, i32) {
    %c0_i32 = arith.constant 0 : i32
    %c0_i32_0 = arith.constant 0 : i32
    %c0_i32_1 = arith.constant 0 : i32
    return %c0_i32, %c0_i32_0 : i32, i32
  }
  func.func @transform_7(%arg0: i32, %arg1: i32) -> (i32, i32) {
    %c0_i32 = arith.constant 0 : i32
    return %arg0, %arg1 : i32, i32
  }
  func.func @transform_8(%arg0: i32, %arg1: i32) -> (i32, i32) {
    %c0_i32 = arith.constant 0 : i32
    %c0_i32_0 = arith.constant 0 : i32
    return %arg0, %c0_i32 : i32, i32
  }
}

</mosaic_0001>

<llo_original>
// kernel: tpu_custom_call.1
$region0: #{tpu_custom_call.1}
  #allocation0 [shape = 'u32[]', space=smem, size = 0x4, offset = 0x4, fixed_abs, tag = 'smem constant byte address 0x4 - core index']
  #allocation1 [shape = 'u32[72,128]{1,0:T(1,128)}', space=vmem, size = 0x9000, scoped, tag = 'internal scratch']
  #allocation2 [shape = 'f32[64,8]{1,0:T(8,128)}', space=vmem, size = 0x8000, scoped, tag = 'scratch operand']
  #allocation3 [shape = 'f32[64,8]{1,0:T(8,128)}', space=vmem, size = 0x8000, scoped, tag = 'scratch operand']
  #allocation4 [shape = 'f32[64,8]{1,0:T(8,128)}', space=vmem, size = 0x8000, scoped, tag = 'scratch operand']
  #allocation5 [shape = 'f32[64,128]{1,0:T(8,128)}', space=vmem, size = 0x8000, scoped, tag = 'scratch operand']
  %s0 = inlined_call_operand.vmem [shape: bf16[256,128], index: 0, kind: input, shape index: {}]
  %s1 = inlined_call_operand.hbm [shape: bf16[128,128], index: 1, kind: input, shape index: {}]
  %s2 = inlined_call_operand.hbm [shape: bf16[128,128], index: 2, kind: input, shape index: {}]
  %s3 = inlined_call_operand.vmem [shape: f32[128,8], index: 3, kind: input, shape index: {}]
  %s4 = inlined_call_operand.vmem [shape: f32[128,8], index: 4, kind: input, shape index: {}]
  %s5 = inlined_call_operand.vmem [shape: f32[1,128], index: 5, kind: input, shape index: {}]
  %s6 = inlined_call_operand.vmem [shape: f32[1,128], index: 6, kind: input, shape index: {}]
  %s7 = inlined_call_operand.vmem [shape: bf16[128,256], index: 7, kind: input, shape index: {}]
  %s8 = inlined_call_operand.hbm [shape: f32[128,128], index: 8, kind: output, shape index: {}]
  %s9 = sld [smem:[#allocation0]]
  $region122: #{tpu_custom_call.1} parent=0
    _
  %s11 = ssub.s32 1, %s9
  %s12 = scalar_select 0, %s11, %s9
  $region1: #{tpu_custom_call.1} parent=0
    #allocation6 [shape = 'u8[32768]{0}', space=vmem, size = 0x8000, scoped, tag = 'input window, operand 1']
    #allocation7 [shape = 's32[2]{0}', space=sflag, size = 0x8, scoped, tag = 'scoped memory for tpu_custom_call.1']
    #allocation8 [shape = 's32[2]{0}', space=sflag, size = 0x8, scoped, tag = 'scoped memory for tpu_custom_call.1']
    #allocation9 [shape = 'u8[32768]{0}', space=vmem, size = 0x8000, scoped, tag = 'input window, operand 2, single buffered']
    #allocation10 [shape = 's32[1]{0}', space=sflag, size = 0x4, scoped, tag = 'scoped memory for tpu_custom_call.1']
    #allocation11 [shape = 'u8[32768]{0}', space=vmem, size = 0x8000, scoped, tag = 'input window, operand 7']
    #allocation12 [shape = 'u8[65536]{0}', space=vmem, size = 0x10000, scoped, tag = 'output window, operand 0']
    %13 = vsyncpa [#allocation7], 0
    %s14 = scalar_lea.sflag [#allocation7], 1
    %15 = vsyncpa %s14, 0
    %16 = vsyncpa [#allocation10], 0
    %17 = vsyncpa [#allocation8], 0
    %s18 = scalar_lea.sflag [#allocation8], 1
    %19 = vsyncpa %s18, 0
    loop: start=0, step=1, limit=6
    $region2: #{tpu_custom_call.1} parent=1 // loop_pre_header
      _
    $region3: #{tpu_custom_call.1} parent=1 // loop_header
      %s21 = sphi 0, %s25
      %p22 = scmp.ge.s32.totalorder %s21, 6
      %s28 = sphi 0, %s40
      %s29 = sphi 0, %s36
      %s30 = sphi 0, %s28
      %s31 = sphi 0, %s29
      %s32 = sphi 0, %s30
      %s33 = sphi 0, %s31
      %s43 = sphi 0, %s45
      %s46 = sphi 0, %s43
      %s47 = sphi 0, %s46
      %s63 = sphi 0, %s47
      %s69 = sphi 0, %s71
      %s72 = sphi 0, %s69
      %s73 = sphi 0, %s72
      %s89 = sphi 0, %s73
      %s93 = sphi 0, %s93
      %s95 = sphi 0, %s93
      %s96 = sphi 0, %s95
      %s110 = sphi 0, %s96
      %s114 = sphi 0, %s114
      %s116 = sphi 0, %s114
      %s117 = sphi 0, %s116
      %s131 = sphi 0, %s117
      %s135 = sphi 0, %s135
      %s137 = sphi 0, %s135
      %s138 = sphi 0, %s137
      %s152 = sphi 0, %s138
      %s156 = sphi 0, %s156
      %s158 = sphi 0, %s156
      %s159 = sphi 0, %s158
      %s173 = sphi 0, %s159
      %s177 = sphi 0, %s177
      %s179 = sphi 0, %s177
      %s180 = sphi 0, %s179
      %s194 = sphi 0, %s180
      %s202 = sphi 0, %s204
      %s205 = sphi 0, %s202
      %s206 = sphi 0, %s205
      %s222 = sphi 0, %s206
      %s228 = sphi 0, %s230
      %s231 = sphi 0, %s228
      %s232 = sphi 0, %s231
      %s248 = sphi 0, %s232
    $region4: #{tpu_custom_call.1} parent=1 // loop_header_branch
      %24 = sbr.rel (%p22) target = $region8
    $region5: #{tpu_custom_call.1} parent=1 // loop_body
      %s26 = ssub.s32 %s21, 1
      %s27 = ssub.s32 %s21, 2
      %s34 = sadd.s32 1, %s29
      %p35 = scmp.ge.s32.totalorder %s34, 2
      %s36 = scalar_select %p35, 0, %s34
      %s37 = sadd.s32 1, %s28
      %s38 = scalar_select %p35, %s37, %s28
      %p39 = scmp.ge.s32.totalorder %s38, 2
      %s40 = scalar_select %p39, 0, %s38
      %s41 = ssub.s32 %s29, %s36
      %p42 = scmp.eq.s32.totalorder %s41, 0
      %s44 = sadd.s32 %s43, 1
      %s45 = scalar_select %p42, %s43, %s44
      %p48 = pneg %p42
      %p49 = scmp.eq.s32.totalorder %s21, 3
      %p50 = por %p48, %p49
      %p51 = scmp.ne.s32.totalorder %s43, %s46
      %p52 = scmp.eq.s32.totalorder %s21, 0
      %p53 = por %p51, %p52
      %p54 = scmp.ne.s32.totalorder %s43, %s46
      %p55 = scmp.eq.s32.totalorder %s26, 3
      %p56 = por %p54, %p55
      %p57 = scmp.ne.s32.totalorder %s46, %s47
      %p58 = scmp.eq.s32.totalorder %s26, 0
      %p59 = por %p57, %p58
      %p60 = scmp.ne.s32.totalorder %s46, %s47
      %p61 = scmp.eq.s32.totalorder %s27, 3
      %p62 = por %p60, %p61
      %p64 = scmp.ne.s32.totalorder %s47, %s63
      %p65 = scmp.eq.s32.totalorder %s27, 0
      %p66 = por %p64, %p65
      %s67 = ssub.s32 %s28, %s40
      %p68 = scmp.eq.s32.totalorder %s67, 0
      %s70 = sadd.s32 %s69, 1
      %s71 = scalar_select %p68, %s69, %s70
      %p74 = pneg %p68
      %p75 = scmp.eq.s32.totalorder %s21, 3
      %p76 = por %p74, %p75
      %p77 = scmp.ne.s32.totalorder %s69, %s72
      %p78 = scmp.eq.s32.totalorder %s21, 0
      %p79 = por %p77, %p78
      %p80 = scmp.ne.s32.totalorder %s69, %s72
      %p81 = scmp.eq.s32.totalorder %s26, 3
      %p82 = por %p80, %p81
      %p83 = scmp.ne.s32.totalorder %s72, %s73
      %p84 = scmp.eq.s32.totalorder %s26, 0
      %p85 = por %p83, %p84
      %p86 = scmp.ne.s32.totalorder %s72, %s73
      %p87 = scmp.eq.s32.totalorder %s27, 3
      %p88 = por %p86, %p87
      %p90 = scmp.ne.s32.totalorder %s73, %s89
      %p91 = scmp.eq.s32.totalorder %s27, 0
      %p92 = por %p90, %p91
      %s94 = sadd.s32 %s93, 1
      %p97 = scmp.eq.s32.totalorder %s21, 3
      %p98 = scmp.ne.s32.totalorder %s93, %s95
      %p99 = scmp.eq.s32.totalorder %s21, 0
      %p100 = por %p98, %p99
      %p101 = scmp.ne.s32.totalorder %s93, %s95
      %p102 = scmp.eq.s32.totalorder %s26, 3
      %p103 = por %p101, %p102
      %p104 = scmp.ne.s32.totalorder %s95, %s96
      %p105 = scmp.eq.s32.totalorder %s26, 0
      %p106 = por %p104, %p105
      %p107 = scmp.ne.s32.totalorder %s95, %s96
      %p108 = scmp.eq.s32.totalorder %s27, 3
      %p109 = por %p107, %p108
      %p111 = scmp.ne.s32.totalorder %s96, %s110
      %p112 = scmp.eq.s32.totalorder %s27, 0
      %p113 = por %p111, %p112
      %s115 = sadd.s32 %s114, 1
      %p118 = scmp.eq.s32.totalorder %s21, 3
      %p119 = scmp.ne.s32.totalorder %s114, %s116
      %p120 = scmp.eq.s32.totalorder %s21, 0
      %p121 = por %p119, %p120
      %p122 = scmp.ne.s32.totalorder %s114, %s116
      %p123 = scmp.eq.s32.totalorder %s26, 3
      %p124 = por %p122, %p123
      %p125 = scmp.ne.s32.totalorder %s116, %s117
      %p126 = scmp.eq.s32.totalorder %s26, 0
      %p127 = por %p125, %p126
      %p128 = scmp.ne.s32.totalorder %s116, %s117
      %p129 = scmp.eq.s32.totalorder %s27, 3
      %p130 = por %p128, %p129
      %p132 = scmp.ne.s32.totalorder %s117, %s131
      %p133 = scmp.eq.s32.totalorder %s27, 0
      %p134 = por %p132, %p133
      %s136 = sadd.s32 %s135, 1
      %p139 = scmp.eq.s32.totalorder %s21, 3
      %p140 = scmp.ne.s32.totalorder %s135, %s137
      %p141 = scmp.eq.s32.totalorder %s21, 0
      %p142 = por %p140, %p141
      %p143 = scmp.ne.s32.totalorder %s135, %s137
      %p144 = scmp.eq.s32.totalorder %s26, 3
      %p145 = por %p143, %p144
      %p146 = scmp.ne.s32.totalorder %s137, %s138
      %p147 = scmp.eq.s32.totalorder %s26, 0
      %p148 = por %p146, %p147
      %p149 = scmp.ne.s32.totalorder %s137, %s138
      %p150 = scmp.eq.s32.totalorder %s27, 3
      %p151 = por %p149, %p150
      %p153 = scmp.ne.s32.totalorder %s138, %s152
      %p154 = scmp.eq.s32.totalorder %s27, 0
      %p155 = por %p153, %p154
      %s157 = sadd.s32 %s156, 1
      %p160 = scmp.eq.s32.totalorder %s21, 3
      %p161 = scmp.ne.s32.totalorder %s156, %s158
      %p162 = scmp.eq.s32.totalorder %s21, 0
      %p163 = por %p161, %p162
      %p164 = scmp.ne.s32.totalorder %s156, %s158
      %p165 = scmp.eq.s32.totalorder %s26, 3
      %p166 = por %p164, %p165
      %p167 = scmp.ne.s32.totalorder %s158, %s159
      %p168 = scmp.eq.s32.totalorder %s26, 0
      %p169 = por %p167, %p168
      %p170 = scmp.ne.s32.totalorder %s158, %s159
      %p171 = scmp.eq.s32.totalorder %s27, 3
      %p172 = por %p170, %p171
      %p174 = scmp.ne.s32.totalorder %s159, %s173
      %p175 = scmp.eq.s32.totalorder %s27, 0
      %p176 = por %p174, %p175
      %s178 = sadd.s32 %s177, 1
      %p181 = scmp.eq.s32.totalorder %s21, 3
      %p182 = scmp.ne.s32.totalorder %s177, %s179
      %p183 = scmp.eq.s32.totalorder %s21, 0
      %p184 = por %p182, %p183
      %p185 = scmp.ne.s32.totalorder %s177, %s179
      %p186 = scmp.eq.s32.totalorder %s26, 3
      %p187 = por %p185, %p186
      %p188 = scmp.ne.s32.totalorder %s179, %s180
      %p189 = scmp.eq.s32.totalorder %s26, 0
      %p190 = por %p188, %p189
      %p191 = scmp.ne.s32.totalorder %s179, %s180
      %p192 = scmp.eq.s32.totalorder %s27, 3
      %p193 = por %p191, %p192
      %p195 = scmp.ne.s32.totalorder %s180, %s194
      %p196 = scmp.eq.s32.totalorder %s27, 0
      %p197 = por %p195, %p196
      %s198 = ssub.s32 %s28, %s40
      %s199 = ssub.s32 %s29, %s36
      %s200 = sor.u32 %s198, %s199
      %p201 = scmp.eq.s32.totalorder %s200, 0
      %s203 = sadd.s32 %s202, 1
      %s204 = scalar_select %p201, %s202, %s203
      %p207 = pneg %p201
      %p208 = scmp.eq.s32.totalorder %s21, 3
      %p209 = por %p207, %p208
      %p210 = scmp.ne.s32.totalorder %s202, %s205
      %p211 = scmp.eq.s32.totalorder %s21, 0
      %p212 = por %p210, %p211
      %p213 = scmp.ne.s32.totalorder %s202, %s205
      %p214 = scmp.eq.s32.totalorder %s26, 3
      %p215 = por %p213, %p214
      %p216 = scmp.ne.s32.totalorder %s205, %s206
      %p217 = scmp.eq.s32.totalorder %s26, 0
      %p218 = por %p216, %p217
      %p219 = scmp.ne.s32.totalorder %s205, %s206
      %p220 = scmp.eq.s32.totalorder %s27, 3
      %p221 = por %p219, %p220
      %p223 = scmp.ne.s32.totalorder %s206, %s222
      %p224 = scmp.eq.s32.totalorder %s27, 0
      %p225 = por %p223, %p224
      %s226 = ssub.s32 %s28, %s40
      %p227 = scmp.eq.s32.totalorder %s226, 0
      %s229 = sadd.s32 %s228, 1
      %s230 = scalar_select %p227, %s228, %s229
      %p233 = pneg %p227
      %p234 = scmp.eq.s32.totalorder %s21, 3
      %p235 = por %p233, %p234
      %p236 = scmp.ne.s32.totalorder %s228, %s231
      %p237 = scmp.eq.s32.totalorder %s21, 0
      %p238 = por %p236, %p237
      %p239 = scmp.ne.s32.totalorder %s228, %s231
      %p240 = scmp.eq.s32.totalorder %s26, 3
      %p241 = por %p239, %p240
      %p242 = scmp.ne.s32.totalorder %s231, %s232
      %p243 = scmp.eq.s32.totalorder %s26, 0
      %p244 = por %p242, %p243
      %p245 = scmp.ne.s32.totalorder %s231, %s232
      %p246 = scmp.eq.s32.totalorder %s27, 3
      %p247 = por %p245, %p246
      %p249 = scmp.ne.s32.totalorder %s232, %s248
      %p250 = scmp.eq.s32.totalorder %s27, 0
      %p251 = por %p249, %p250
      %p252 = scmp.le.s32.totalorder 1, %s21
      %p253 = scmp.lt.s32.totalorder %s21, 5
      %p254 = pnand %p252, %p253
      %p255 = pneg %p254
      // Predicated region
      $region9: #{tpu_custom_call.1} parent=5 // pred_check
        _
      $region10: #{tpu_custom_call.1} parent=5 // pred_check_branch
        %257 = sbr.rel (%p254) target = $region12
      $region11: #{tpu_custom_call.1} parent=5 // pred_region
        %s258 = ssub.s32 %s21, 1
        // Predicated region
        $region13: #{tpu_custom_call.1} parent=11 // pred_check
          %p259 = pneg %p106
        $region14: #{tpu_custom_call.1} parent=11 // pred_check_branch
          %261 = sbr.rel (%p259) target = $region16
        $region15: #{tpu_custom_call.1} parent=11 // pred_region
          %263 = vsyncadd [#allocation10], 0
          %s264 = sshll.u32 %s2, 4
          %s265 = int_to_ptr.hbm [resolvable:$true] %s264
          %s266 = sshll.u32 [#allocation9], 4
          %s267 = int_to_ptr.vmem [resolvable:$true] %s266
          %272 = dma.hbm_to_vmem [thread:$0]  %s265, 1024, %s267, [#allocation10], 64, 64, 4
        $region16: #{tpu_custom_call.1} parent=11 // pred_fallthru
          _
        // Predicated region
        $region17: #{tpu_custom_call.1} parent=11 // pred_check
          %p273 = pneg %p127
        $region18: #{tpu_custom_call.1} parent=11 // pred_check_branch
          %275 = sbr.rel (%p273) target = $region20
        $region19: #{tpu_custom_call.1} parent=11 // pred_region
          _
        $region20: #{tpu_custom_call.1} parent=11 // pred_fallthru
          _
        // Predicated region
        $region21: #{tpu_custom_call.1} parent=11 // pred_check
          %p276 = pneg %p148
        $region22: #{tpu_custom_call.1} parent=11 // pred_check_branch
          %278 = sbr.rel (%p276) target = $region24
        $region23: #{tpu_custom_call.1} parent=11 // pred_region
          _
        $region24: #{tpu_custom_call.1} parent=11 // pred_fallthru
          _
        // Predicated region
        $region25: #{tpu_custom_call.1} parent=11 // pred_check
          %p279 = pneg %p169
        $region26: #{tpu_custom_call.1} parent=11 // pred_check_branch
          %281 = sbr.rel (%p279) target = $region28
        $region27: #{tpu_custom_call.1} parent=11 // pred_region
          _
        $region28: #{tpu_custom_call.1} parent=11 // pred_fallthru
          _
        // Predicated region
        $region29: #{tpu_custom_call.1} parent=11 // pred_check
          %p282 = pneg %p190
        $region30: #{tpu_custom_call.1} parent=11 // pred_check_branch
          %284 = sbr.rel (%p282) target = $region32
        $region31: #{tpu_custom_call.1} parent=11 // pred_region
          _
        $region32: #{tpu_custom_call.1} parent=11 // pred_fallthru
          _
      $region12: #{tpu_custom_call.1} parent=5 // pred_fallthru
        _
      %p285 = scmp.lt.s32.totalorder %s21, 4
      // Predicated region
      $region33: #{tpu_custom_call.1} parent=5 // pred_check
        %p286 = pneg %p285
      $region34: #{tpu_custom_call.1} parent=5 // pred_check_branch
        %288 = sbr.rel (%p286) target = $region36
      $region35: #{tpu_custom_call.1} parent=5 // pred_region
        // Predicated region
        $region37: #{tpu_custom_call.1} parent=35 // pred_check
          %p289 = pneg %p53
        $region38: #{tpu_custom_call.1} parent=35 // pred_check_branch
          %291 = sbr.rel (%p289) target = $region40
        $region39: #{tpu_custom_call.1} parent=35 // pred_region
          %s292 = smul.u32 16, %s29
          %p293 = scmp.lt.s32.totalorder %s292, 31
          %s294 = scalar_select %p293, %s292, 31
          %s295 = smul.addr %s294, 4
          %s296 = scalar_lea.vmem %s0, %s295
          %s297 = smul.u32 16, %s29
        $region40: #{tpu_custom_call.1} parent=35 // pred_fallthru
          _
        // Predicated region
        $region41: #{tpu_custom_call.1} parent=35 // pred_check
          %p298 = pneg %p79
        $region42: #{tpu_custom_call.1} parent=35 // pred_check_branch
          %300 = sbr.rel (%p298) target = $region44
        $region43: #{tpu_custom_call.1} parent=35 // pred_region
          %s301 = sand.u32 %s69, 1
          %s302 = scalar_lea.sflag [#allocation7], %s301
          %s303 = sand.u32 %s69, 1
          %s304 = smul.addr %s303, 32
          %s305 = scalar_lea.vmem [#allocation6], %s304
          %s306 = smul.u32 8, %s28
          %308 = vsyncadd %s302, 0
          %s309 = smul.addr %s306, 4
          %s310 = scalar_lea.hbm %s1, %s309
          %s311 = sshll.u32 %s310, 4
          %s312 = int_to_ptr.hbm [resolvable:$true] %s311
          %s313 = sshll.u32 %s305, 4
          %s314 = int_to_ptr.vmem [resolvable:$true] %s313
          %319 = dma.hbm_to_vmem [thread:$0]  %s312, 512, %s314, %s302, 64, 64, 4
        $region44: #{tpu_custom_call.1} parent=35 // pred_fallthru
          _
        // Predicated region
        $region45: #{tpu_custom_call.1} parent=35 // pred_check
          %p320 = pneg %p212
        $region46: #{tpu_custom_call.1} parent=35 // pred_check_branch
          %322 = sbr.rel (%p320) target = $region48
        $region47: #{tpu_custom_call.1} parent=35 // pred_region
          %s323 = sand.u32 %s202, 1
          %s324 = sand.u32 %s202, 1
          %s325 = smul.addr %s324, 32
          %s326 = scalar_lea.vmem [#allocation11], %s325
          %s327 = smul.u32 8, %s28
          %s328 = smul.addr %s327, 2
          %s329 = sadd.s32 %s29, %s328
          %s330 = smul.addr %s329, 4
          %s331 = scalar_lea.vmem %s7, %s330
          // Predicated region
          $region49: #{tpu_custom_call.1} parent=47 // pred_check
            _
          $region50: #{tpu_custom_call.1} parent=47 // pred_check_branch
            %333 = sbr.rel (0) target = $region52
          $region51: #{tpu_custom_call.1} parent=47 // pred_region
            // Predicated region
            $region53: #{tpu_custom_call.1} parent=51 // pred_check
              _
            $region54: #{tpu_custom_call.1} parent=51 // pred_check_branch
              %335 = sbr.rel target = $region56
            $region55: #{tpu_custom_call.1} parent=51 // pred_region
              // Predicated region
              $region68: #{tpu_custom_call.1} parent=55 // pred_check
                _
              $region69: #{tpu_custom_call.1} parent=55 // pred_check_branch
                %365 = sbr.rel (0) target = $region71
              $region70: #{tpu_custom_call.1} parent=55 // pred_region
                loop: start=0, step=1, limit=1
                $region72: #{tpu_custom_call.1} parent=70 // loop_pre_header
                  _
                $region73: #{tpu_custom_call.1} parent=70 // loop_header
                  %s367 = sphi 0, %s371
                  %p368 = scmp.ge.s32.totalorder %s367, 1
                  %s372 = sphi %s331, %s331
                  %s373 = sphi %s326, %s326
                $region74: #{tpu_custom_call.1} parent=70 // loop_header_branch
                  %370 = sbr.rel (%p368) target = $region78
                $region75: #{tpu_custom_call.1} parent=70 // loop_body
                  _
                $region76: #{tpu_custom_call.1} parent=70 // loop_footer
                  %s371 = sadd.s32 1, %s367
                $region77: #{tpu_custom_call.1} parent=70 // loop_footer_branch
                  %366 = sbr.rel target = $region73
                $region78: #{tpu_custom_call.1} parent=70 // loop_exit
                  _
                %s375 = ssub.s32 16, 1
                loop: start=0, step=1, limit=1
                $region79: #{tpu_custom_call.1} parent=70 // loop_pre_header
                  _
                $region80: #{tpu_custom_call.1} parent=70 // loop_header
                  %s377 = sphi 0, %s381
                  %p378 = scmp.ge.s32.totalorder %s377, 1
                  %s382 = sphi %s331, %s331
                  %s383 = sphi %s326, %s326
                $region81: #{tpu_custom_call.1} parent=70 // loop_header_branch
                  %380 = sbr.rel (%p378) target = $region85
                $region82: #{tpu_custom_call.1} parent=70 // loop_body
                  %v384 = vld [vmem:[%s382] sm:%s375]
                  %385 = vst [vmem:[%s383] sm:%s375] %v384
                  %v386 = vld [vmem:[%s382 + $0x8] sm:%s375]
                  %387 = vst [vmem:[%s383 + $0x4] sm:%s375] %v386
                  %v388 = vld [vmem:[%s382 + $0x10] sm:%s375]
                  %389 = vst [vmem:[%s383 + $0x8] sm:%s375] %v388
                  %v390 = vld [vmem:[%s382 + $0x18] sm:%s375]
                  %391 = vst [vmem:[%s383 + $0xc] sm:%s375] %v390
                  %v392 = vld [vmem:[%s382 + $0x20] sm:%s375]
                  %393 = vst [vmem:[%s383 + $0x10] sm:%s375] %v392
                  %v394 = vld [vmem:[%s382 + $0x28] sm:%s375]
                  %395 = vst [vmem:[%s383 + $0x14] sm:%s375] %v394
                  %v396 = vld [vmem:[%s382 + $0x30] sm:%s375]
                  %397 = vst [vmem:[%s383 + $0x18] sm:%s375] %v396
                  %v398 = vld [vmem:[%s382 + $0x38] sm:%s375]
                  %399 = vst [vmem:[%s383 + $0x1c] sm:%s375] %v398
                $region83: #{tpu_custom_call.1} parent=70 // loop_footer
                  %s381 = sadd.s32 1, %s377
                $region84: #{tpu_custom_call.1} parent=70 // loop_footer_branch
                  %376 = sbr.rel target = $region80
                $region85: #{tpu_custom_call.1} parent=70 // loop_exit
                  _
              $region71: #{tpu_custom_call.1} parent=55 // pred_fallthru
                _
            $region56: #{tpu_custom_call.1} parent=51 // pred_fallthru
              _
            // Predicated region
            $region57: #{tpu_custom_call.1} parent=51 // pred_check
              _
            $region58: #{tpu_custom_call.1} parent=51 // pred_check_branch
              %337 = sbr.rel (0) target = $region60
            $region59: #{tpu_custom_call.1} parent=51 // pred_region
              %s339 = ssub.s32 16, 1
              loop: start=0, step=1, limit=1
              $region61: #{tpu_custom_call.1} parent=59 // loop_pre_header
                _
              $region62: #{tpu_custom_call.1} parent=59 // loop_header
                %s341 = sphi 0, %s345
                %p342 = scmp.ge.s32.totalorder %s341, 1
                %s346 = sphi %s331, %s331
                %s347 = sphi %s326, %s326
              $region63: #{tpu_custom_call.1} parent=59 // loop_header_branch
                %344 = sbr.rel (%p342) target = $region67
              $region64: #{tpu_custom_call.1} parent=59 // loop_body
                %v348 = vld [vmem:[%s346] sm:%s339]
                %349 = vst [vmem:[%s347] sm:%s339] %v348
                %v350 = vld [vmem:[%s346 + $0x8] sm:%s339]
                %351 = vst [vmem:[%s347 + $0x4] sm:%s339] %v350
                %v352 = vld [vmem:[%s346 + $0x10] sm:%s339]
                %353 = vst [vmem:[%s347 + $0x8] sm:%s339] %v352
                %v354 = vld [vmem:[%s346 + $0x18] sm:%s339]
                %355 = vst [vmem:[%s347 + $0xc] sm:%s339] %v354
                %v356 = vld [vmem:[%s346 + $0x20] sm:%s339]
                %357 = vst [vmem:[%s347 + $0x10] sm:%s339] %v356
                %v358 = vld [vmem:[%s346 + $0x28] sm:%s339]
                %359 = vst [vmem:[%s347 + $0x14] sm:%s339] %v358
                %v360 = vld [vmem:[%s346 + $0x30] sm:%s339]
                %361 = vst [vmem:[%s347 + $0x18] sm:%s339] %v360
                %v362 = vld [vmem:[%s346 + $0x38] sm:%s339]
                %363 = vst [vmem:[%s347 + $0x1c] sm:%s339] %v362
              $region65: #{tpu_custom_call.1} parent=59 // loop_footer
                %s345 = sadd.s32 1, %s341
              $region66: #{tpu_custom_call.1} parent=59 // loop_footer_branch
                %340 = sbr.rel target = $region62
              $region67: #{tpu_custom_call.1} parent=59 // loop_exit
                _
            $region60: #{tpu_custom_call.1} parent=51 // pred_fallthru
              _
          $region52: #{tpu_custom_call.1} parent=47 // pred_fallthru
            _
          %400 = vnop
        $region48: #{tpu_custom_call.1} parent=35 // pred_fallthru
          _
      $region36: #{tpu_custom_call.1} parent=5 // pred_fallthru
        _
      %p401 = scmp.le.s32.totalorder 1, %s21
      %p402 = scmp.lt.s32.totalorder %s21, 5
      %p403 = pnand %p401, %p402
      %p404 = pneg %p403
      // Predicated region
      $region86: #{tpu_custom_call.1} parent=5 // pred_check
        _
      $region87: #{tpu_custom_call.1} parent=5 // pred_check_branch
        %406 = sbr.rel (%p403) target = $region89
      $region88: #{tpu_custom_call.1} parent=5 // pred_region
        %s407 = ssub.s32 %s21, 1
        %s408 = sand.u32 %s72, 1
        %s409 = scalar_lea.sflag [#allocation7], %s408
        %s410 = sand.u32 %s72, 1
        %s411 = smul.addr %s410, 32
        %s412 = scalar_lea.vmem [#allocation6], %s411
        // Predicated region
        $region90: #{tpu_custom_call.1} parent=88 // pred_check
          %p413 = pneg %p85
        $region91: #{tpu_custom_call.1} parent=88 // pred_check_branch
          %415 = sbr.rel (%p413) target = $region93
        $region92: #{tpu_custom_call.1} parent=88 // pred_region
          %417 = dma.done %s409, 512
        $region93: #{tpu_custom_call.1} parent=88 // pred_fallthru
          _
        // Predicated region
        $region94: #{tpu_custom_call.1} parent=88 // pred_check
          %p418 = pneg %p106
        $region95: #{tpu_custom_call.1} parent=88 // pred_check_branch
          %420 = sbr.rel (%p418) target = $region97
        $region96: #{tpu_custom_call.1} parent=88 // pred_region
          %422 = dma.done [#allocation10], 1024
        $region97: #{tpu_custom_call.1} parent=88 // pred_fallthru
          _
        %s423 = sand.u32 %s205, 1
        %s424 = sand.u32 %s205, 1
        %s425 = smul.addr %s424, 32
        %s426 = scalar_lea.vmem [#allocation11], %s425
        // Predicated region
        $region98: #{tpu_custom_call.1} parent=88 // pred_check
          %p427 = pneg %p218
        $region99: #{tpu_custom_call.1} parent=88 // pred_check_branch
          %429 = sbr.rel (%p427) target = $region101
        $region100: #{tpu_custom_call.1} parent=88 // pred_region
          _
        $region101: #{tpu_custom_call.1} parent=88 // pred_fallthru
          _
        %s430 = smul.u32 16, %s31
        %p431 = scmp.lt.s32.totalorder %s430, 31
        %s432 = scalar_select %p431, %s430, 31
        %s433 = smul.addr %s432, 4
        %s434 = scalar_lea.vmem %s0, %s433
        %p435 = pneg %p59
        %p436 = pneg %p56
        %s437 = sand.u32 %s72, 1
        %s438 = scalar_lea.sflag [#allocation7], %s437
        %s439 = sand.u32 %s72, 1
        %s440 = smul.addr %s439, 32
        %s441 = scalar_lea.vmem [#allocation6], %s440
        %p442 = pneg %p85
        %p443 = pneg %p82
        %p444 = pneg %p106
        %p445 = pneg %p103
        %p446 = pneg %p127
        %p447 = pneg %p124
        %p448 = pneg %p148
        %p449 = pneg %p145
        %p450 = pneg %p169
        %p451 = pneg %p166
        %p452 = pneg %p190
        %p453 = pneg %p187
        %s454 = sand.u32 %s205, 1
        %s455 = sand.u32 %s205, 1
        %s456 = smul.addr %s455, 32
        %s457 = scalar_lea.vmem [#allocation11], %s456
        %p458 = pneg %p218
        %p459 = pneg %p215
        %p460 = pneg %p244
        %p461 = pneg %p241
        %s462 = sand.u32 %s231, 1
        %s463 = scalar_lea.sflag [#allocation8], %s462
        %s464 = sand.u32 %s231, 1
        %s465 = smul.addr %s464, 64
        %s466 = scalar_lea.vmem [#allocation12], %s465
        %s467 = smul.u32 16, %s31
        %p468 = scmp.lt.s32.totalorder %s467, 31
        %s469 = scalar_select %p468, %s467, 31
        %s470 = smul.addr %s469, 4
        %s471 = scalar_lea.vmem %s0, %s470
        %s472 = smul.u32 16, %s31
        %s473 = smul.u32 8, %s30
        %s474 = smul.u32 8, %s30
        %s475 = smul.u32 8, %s30
        %p476 = scmp.eq.s32.totalorder %s31, 0
        // Predicated region
        $region102: #{tpu_custom_call.1} parent=88 // pred_check
          %p477 = pneg %p476
        $region103: #{tpu_custom_call.1} parent=88 // pred_check_branch
          %479 = sbr.rel (%p477) target = $region105
        $region104: #{tpu_custom_call.1} parent=88 // pred_region
          %v480 = vld [vmem:[%s412] sm:$0xf]
          %v481 = vld [vmem:[%s412 + $0x4] sm:$0xf]
          %v482 = vld [vmem:[%s412 + $0x8] sm:$0xf]
          %v483 = vld [vmem:[%s412 + $0xc] sm:$0xf]
          %v484 = vld [vmem:[%s412 + $0x10] sm:$0xf]
          %v485 = vld [vmem:[%s412 + $0x14] sm:$0xf]
          %v486 = vld [vmem:[%s412 + $0x18] sm:$0xf]
          %v487 = vld [vmem:[%s412 + $0x1c] sm:$0xf]
          %v488 = vld [vmem:[#allocation9] sm:$0xf]
          %v489 = vld [vmem:[#allocation9 + $0x4] sm:$0xf]
          %v490 = vld [vmem:[#allocation9 + $0x8] sm:$0xf]
          %v491 = vld [vmem:[#allocation9 + $0xc] sm:$0xf]
          %v492 = vld [vmem:[#allocation9 + $0x10] sm:$0xf]
          %v493 = vld [vmem:[#allocation9 + $0x14] sm:$0xf]
          %v494 = vld [vmem:[#allocation9 + $0x18] sm:$0xf]
          %v495 = vld [vmem:[#allocation9 + $0x1c] sm:$0xf]
          %v496 = vld [vmem:[#allocation9 + $0x20] sm:$0xf]
          %v497 = vld [vmem:[#allocation9 + $0x24] sm:$0xf]
          %v498 = vld [vmem:[#allocation9 + $0x28] sm:$0xf]
          %v499 = vld [vmem:[#allocation9 + $0x2c] sm:$0xf]
          %v500 = vld [vmem:[#allocation9 + $0x30] sm:$0xf]
          %v501 = vld [vmem:[#allocation9 + $0x34] sm:$0xf]
          %v502 = vld [vmem:[#allocation9 + $0x38] sm:$0xf]
          %v503 = vld [vmem:[#allocation9 + $0x3c] sm:$0xf]
          %v512 = vunpack.c.l.b16 %v480
          %v513 = vunpack.c.l.b16 %v481
          %v514 = vunpack.c.l.b16 %v482
          %v515 = vunpack.c.l.b16 %v483
          %v516 = vunpack.c.l.b16 %v484
          %v517 = vunpack.c.l.b16 %v485
          %v518 = vunpack.c.l.b16 %v486
          %v519 = vunpack.c.l.b16 %v487
          %v520 = vpack.c.b16 %v513, %v512
          %v521 = vpack.c.b16 %v515, %v514
          %v522 = vpack.c.b16 %v517, %v516
          %v523 = vpack.c.b16 %v519, %v518
          %v544 = vunpack.c.l.b16 %v488
          %v545 = vunpack.c.l.b16 %v489
          %v546 = vunpack.c.l.b16 %v490
          %v547 = vunpack.c.l.b16 %v491
          %v548 = vunpack.c.l.b16 %v492
          %v549 = vunpack.c.l.b16 %v493
          %v550 = vunpack.c.l.b16 %v494
          %v551 = vunpack.c.l.b16 %v495
          %v552 = vunpack.c.l.b16 %v496
          %v553 = vunpack.c.l.b16 %v497
          %v554 = vunpack.c.l.b16 %v498
          %v555 = vunpack.c.l.b16 %v499
          %v556 = vunpack.c.l.b16 %v500
          %v557 = vunpack.c.l.b16 %v501
          %v558 = vunpack.c.l.b16 %v502
          %v559 = vunpack.c.l.b16 %v503
          %v560 = vpack.c.b16 %v545, %v544
          %v561 = vpack.c.b16 %v547, %v546
          %v562 = vpack.c.b16 %v549, %v548
          %v563 = vpack.c.b16 %v551, %v550
          %v564 = vpack.c.b16 %v553, %v552
          %v565 = vpack.c.b16 %v555, %v554
          %v566 = vpack.c.b16 %v557, %v556
          %v567 = vpack.c.b16 %v559, %v558
          %576 = vmatpush.bf16.msra.mxu0 %v567
          %577 = vmatpush.bf16.msra.mxu0 %v566
          %578 = vmatpush.bf16.msra.mxu0 %v565
          %579 = vmatpush.bf16.msra.mxu0 %v564
          %580 = vmatpush.bf16.msra.mxu0 %v563
          %581 = vmatpush.bf16.msra.mxu0 %v562
          %582 = vmatpush.bf16.msra.mxu0 %v561
          %583 = vmatpush.bf16.msra.mxu0 %v560
          %584 = vmatmul.bf16.gmra.mxu0 %v520
          %v585 = vpop.f32.mrf.mxu0
          %v586 = vadd.f32 0.0, %v585
          %v587 = vpop.f32.mrf.mxu0
          %v588 = vadd.f32 0.0, %v587
          %589 = vmatmul.bf16.gmra.mxu0 %v521
          %v590 = vpop.f32.mrf.mxu0
          %v591 = vadd.f32 0.0, %v590
          %v592 = vpop.f32.mrf.mxu0
          %v593 = vadd.f32 0.0, %v592
          %594 = vmatmul.bf16.gmra.mxu0 %v522
          %v595 = vpop.f32.mrf.mxu0
          %v596 = vadd.f32 0.0, %v595
          %v597 = vpop.f32.mrf.mxu0
          %v598 = vadd.f32 0.0, %v597
          %599 = vmatmul.bf16.gmra.mxu0 %v523
          %v600 = vpop.f32.mrf.mxu0
          %v601 = vadd.f32 0.0, %v600
          %v602 = vpop.f32.mrf.mxu0
          %v603 = vadd.f32 0.0, %v602
          %604 = vdwg.mxu0
          %v605 = vld [vmem:[%s4] sm:$0xff]
          %v606 = vld [vmem:[%s4 + $0x8] sm:$0xff]
          %v607 = vld [vmem:[%s4 + $0x10] sm:$0xff]
          %v608 = vld [vmem:[%s4 + $0x18] sm:$0xff]
          %v609 = vld [vmem:[%s4 + $0x20] sm:$0xff]
          %v610 = vld [vmem:[%s4 + $0x28] sm:$0xff]
          %v611 = vld [vmem:[%s4 + $0x30] sm:$0xff]
          %v612 = vld [vmem:[%s4 + $0x38] sm:$0xff]
          %v613 = vld [vmem:[%s4 + $0x40] sm:$0xff]
          %v614 = vld [vmem:[%s4 + $0x48] sm:$0xff]
          %v615 = vld [vmem:[%s4 + $0x50] sm:$0xff]
          %v616 = vld [vmem:[%s4 + $0x58] sm:$0xff]
          %v617 = vld [vmem:[%s4 + $0x60] sm:$0xff]
          %v618 = vld [vmem:[%s4 + $0x68] sm:$0xff]
          %v619 = vld [vmem:[%s4 + $0x70] sm:$0xff]
          %v620 = vld [vmem:[%s4 + $0x78] sm:$0xff]
          %621 = vmatpush.msra.mxu0 %v620
          %622 = vmatpush.msra.mxu0 %v619
          %623 = vmatpush.msra.mxu0 %v618
          %624 = vmatpush.msra.mxu0 %v617
          %625 = vmatpush.msra.mxu0 %v616
          %626 = vmatpush.msra.mxu0 %v615
          %627 = vmatpush.msra.mxu0 %v614
          %628 = vmatpush.msra.mxu0 %v613
          %629 = vmatpush.msra.mxu0 %v612
          %630 = vmatpush.msra.mxu0 %v611
          %631 = vmatpush.msra.mxu0 %v610
          %632 = vmatpush.msra.mxu0 %v609
          %633 = vmatpush.msra.mxu0 %v608
          %634 = vmatpush.msra.mxu0 %v607
          %635 = vmatpush.msra.mxu0 %v606
          %636 = vmatpush.msra.mxu0 %v605
          %637 = vmatmul.f32.gmra.mxu0 %v586
          %v638 = vpop.f32.mrf.mxu0
          %v639 = vadd.f32 0.0, %v638
          %640 = vmatmul.f32.gmra.mxu0 %v588
          %v641 = vpop.f32.mrf.mxu0
          %v642 = vadd.f32 0.0, %v641
          %643 = vmatmul.f32.gmra.mxu0 %v591
          %v644 = vpop.f32.mrf.mxu0
          %v645 = vadd.f32 0.0, %v644
          %646 = vmatmul.f32.gmra.mxu0 %v593
          %v647 = vpop.f32.mrf.mxu0
          %v648 = vadd.f32 0.0, %v647
          %649 = vmatmul.f32.gmra.mxu0 %v596
          %v650 = vpop.f32.mrf.mxu0
          %v651 = vadd.f32 0.0, %v650
          %652 = vmatmul.f32.gmra.mxu0 %v598
          %v653 = vpop.f32.mrf.mxu0
          %v654 = vadd.f32 0.0, %v653
          %655 = vmatmul.f32.gmra.mxu0 %v601
          %v656 = vpop.f32.mrf.mxu0
          %v657 = vadd.f32 0.0, %v656
          %658 = vmatmul.f32.gmra.mxu0 %v603
          %v659 = vpop.f32.mrf.mxu0
          %v660 = vadd.f32 0.0, %v659
          %661 = vdwg.mxu0
          %vm662 = vcmask 64512
          %663 = vst.msk [vmem:[#allocation2] sm:$0xff] %vm662, %v639
          %664 = vst.msk [vmem:[#allocation2 + $0x8] sm:$0xff] %vm662, %v642
          %665 = vst.msk [vmem:[#allocation2 + $0x10] sm:$0xff] %vm662, %v645
          %666 = vst.msk [vmem:[#allocation2 + $0x18] sm:$0xff] %vm662, %v648
          %667 = vst.msk [vmem:[#allocation2 + $0x20] sm:$0xff] %vm662, %v651
          %668 = vst.msk [vmem:[#allocation2 + $0x28] sm:$0xff] %vm662, %v654
          %669 = vst.msk [vmem:[#allocation2 + $0x30] sm:$0xff] %vm662, %v657
          %670 = vst.msk [vmem:[#allocation2 + $0x38] sm:$0xff] %vm662, %v660
          %671 = vst.msk [vmem:[#allocation3] sm:$0xff] %vm662, -1e+30
          %672 = vst.msk [vmem:[#allocation3 + $0x8] sm:$0xff] %vm662, -1e+30
          %673 = vst.msk [vmem:[#allocation3 + $0x10] sm:$0xff] %vm662, -1e+30
          %674 = vst.msk [vmem:[#allocation3 + $0x18] sm:$0xff] %vm662, -1e+30
          %675 = vst.msk [vmem:[#allocation3 + $0x20] sm:$0xff] %vm662, -1e+30
          %676 = vst.msk [vmem:[#allocation3 + $0x28] sm:$0xff] %vm662, -1e+30
          %677 = vst.msk [vmem:[#allocation3 + $0x30] sm:$0xff] %vm662, -1e+30
          %678 = vst.msk [vmem:[#allocation3 + $0x38] sm:$0xff] %vm662, -1e+30
          %679 = vst.msk [vmem:[#allocation4] sm:$0xff] %vm662, 0.0
          %680 = vst.msk [vmem:[#allocation4 + $0x8] sm:$0xff] %vm662, 0.0
          %681 = vst.msk [vmem:[#allocation4 + $0x10] sm:$0xff] %vm662, 0.0
          %682 = vst.msk [vmem:[#allocation4 + $0x18] sm:$0xff] %vm662, 0.0
          %683 = vst.msk [vmem:[#allocation4 + $0x20] sm:$0xff] %vm662, 0.0
          %684 = vst.msk [vmem:[#allocation4 + $0x28] sm:$0xff] %vm662, 0.0
          %685 = vst.msk [vmem:[#allocation4 + $0x30] sm:$0xff] %vm662, 0.0
          %686 = vst.msk [vmem:[#allocation4 + $0x38] sm:$0xff] %vm662, 0.0
          %687 = vst [vmem:[#allocation5] sm:$0xff] 0.0
          %688 = vst [vmem:[#allocation5 + $0x8] sm:$0xff] 0.0
          %689 = vst [vmem:[#allocation5 + $0x10] sm:$0xff] 0.0
          %690 = vst [vmem:[#allocation5 + $0x18] sm:$0xff] 0.0
          %691 = vst [vmem:[#allocation5 + $0x20] sm:$0xff] 0.0
          %692 = vst [vmem:[#allocation5 + $0x28] sm:$0xff] 0.0
          %693 = vst [vmem:[#allocation5 + $0x30] sm:$0xff] 0.0
          %694 = vst [vmem:[#allocation5 + $0x38] sm:$0xff] 0.0
        $region105: #{tpu_custom_call.1} parent=88 // pred_fallthru
          _
        %v695 = vld [vmem:[%s471] sm:$0xf]
        %v696 = vld [vmem:[%s471 + $0x4] sm:$0xf]
        %v697 = vld [vmem:[%s471 + $0x8] sm:$0xf]
        %v698 = vld [vmem:[%s471 + $0xc] sm:$0xf]
        %v699 = vld [vmem:[%s471 + $0x10] sm:$0xf]
        %v700 = vld [vmem:[%s471 + $0x14] sm:$0xf]
        %v701 = vld [vmem:[%s471 + $0x18] sm:$0xf]
        %v702 = vld [vmem:[%s471 + $0x1c] sm:$0xf]
        %v703 = vld [vmem:[%s471 + $0x20] sm:$0xf]
        %v704 = vld [vmem:[%s471 + $0x24] sm:$0xf]
        %v705 = vld [vmem:[%s471 + $0x28] sm:$0xf]
        %v706 = vld [vmem:[%s471 + $0x2c] sm:$0xf]
        %v707 = vld [vmem:[%s471 + $0x30] sm:$0xf]
        %v708 = vld [vmem:[%s471 + $0x34] sm:$0xf]
        %v709 = vld [vmem:[%s471 + $0x38] sm:$0xf]
        %v710 = vld [vmem:[%s471 + $0x3c] sm:$0xf]
        %v711 = vld [vmem:[#allocation9] sm:$0xf]
        %v712 = vld [vmem:[#allocation9 + $0x4] sm:$0xf]
        %v713 = vld [vmem:[#allocation9 + $0x8] sm:$0xf]
        %v714 = vld [vmem:[#allocation9 + $0xc] sm:$0xf]
        %v715 = vld [vmem:[#allocation9 + $0x10] sm:$0xf]
        %v716 = vld [vmem:[#allocation9 + $0x14] sm:$0xf]
        %v717 = vld [vmem:[#allocation9 + $0x18] sm:$0xf]
        %v718 = vld [vmem:[#allocation9 + $0x1c] sm:$0xf]
        %v719 = vld [vmem:[#allocation9 + $0x20] sm:$0xf]
        %v720 = vld [vmem:[#allocation9 + $0x24] sm:$0xf]
        %v721 = vld [vmem:[#allocation9 + $0x28] sm:$0xf]
        %v722 = vld [vmem:[#allocation9 + $0x2c] sm:$0xf]
        %v723 = vld [vmem:[#allocation9 + $0x30] sm:$0xf]
        %v724 = vld [vmem:[#allocation9 + $0x34] sm:$0xf]
        %v725 = vld [vmem:[#allocation9 + $0x38] sm:$0xf]
        %v726 = vld [vmem:[#allocation9 + $0x3c] sm:$0xf]
        %v743 = vunpack.c.l.b16 %v695
        %v744 = vunpack.c.l.b16 %v696
        %v745 = vunpack.c.l.b16 %v697
        %v746 = vunpack.c.l.b16 %v698
        %v747 = vunpack.c.l.b16 %v699
        %v748 = vunpack.c.l.b16 %v700
        %v749 = vunpack.c.l.b16 %v701
        %v750 = vunpack.c.l.b16 %v702
        %v751 = vunpack.c.l.b16 %v703
        %v752 = vunpack.c.l.b16 %v704
        %v753 = vunpack.c.l.b16 %v705
        %v754 = vunpack.c.l.b16 %v706
        %v755 = vunpack.c.l.b16 %v707
        %v756 = vunpack.c.l.b16 %v708
        %v757 = vunpack.c.l.b16 %v709
        %v758 = vunpack.c.l.b16 %v710
        %v759 = vpack.c.b16 %v744, %v743
        %v760 = vpack.c.b16 %v746, %v745
        %v761 = vpack.c.b16 %v748, %v747
        %v762 = vpack.c.b16 %v750, %v749
        %v763 = vpack.c.b16 %v752, %v751
        %v764 = vpack.c.b16 %v754, %v753
        %v765 = vpack.c.b16 %v756, %v755
        %v766 = vpack.c.b16 %v758, %v757
        %v791 = vunpack.c.l.b16 %v711
        %v792 = vunpack.c.l.b16 %v712
        %v793 = vunpack.c.l.b16 %v713
        %v794 = vunpack.c.l.b16 %v714
        %v795 = vunpack.c.l.b16 %v715
        %v796 = vunpack.c.l.b16 %v716
        %v797 = vunpack.c.l.b16 %v717
        %v798 = vunpack.c.l.b16 %v718
        %v799 = vunpack.c.l.b16 %v719
        %v800 = vunpack.c.l.b16 %v720
        %v801 = vunpack.c.l.b16 %v721
        %v802 = vunpack.c.l.b16 %v722
        %v803 = vunpack.c.l.b16 %v723
        %v804 = vunpack.c.l.b16 %v724
        %v805 = vunpack.c.l.b16 %v725
        %v806 = vunpack.c.l.b16 %v726
        %v807 = vpack.c.b16 %v792, %v791
        %v808 = vpack.c.b16 %v794, %v793
        %v809 = vpack.c.b16 %v796, %v795
        %v810 = vpack.c.b16 %v798, %v797
        %v811 = vpack.c.b16 %v800, %v799
        %v812 = vpack.c.b16 %v802, %v801
        %v813 = vpack.c.b16 %v804, %v803
        %v814 = vpack.c.b16 %v806, %v805
        %823 = vmatpush.bf16.msra.mxu0 %v814
        %824 = vmatpush.bf16.msra.mxu0 %v813
        %825 = vmatpush.bf16.msra.mxu0 %v812
        %826 = vmatpush.bf16.msra.mxu0 %v811
        %827 = vmatpush.bf16.msra.mxu0 %v810
        %828 = vmatpush.bf16.msra.mxu0 %v809
        %829 = vmatpush.bf16.msra.mxu0 %v808
        %830 = vmatpush.bf16.msra.mxu0 %v807
        %831 = vmatmul.bf16.gmra.mxu0 %v759
        %v832 = vpop.f32.mrf.mxu0
        %v833 = vadd.f32 0.0, %v832
        %v834 = vpop.f32.mrf.mxu0
        %v835 = vadd.f32 0.0, %v834
        %836 = vmatmul.bf16.gmra.mxu0 %v760
        %v837 = vpop.f32.mrf.mxu0
        %v838 = vadd.f32 0.0, %v837
        %v839 = vpop.f32.mrf.mxu0
        %v840 = vadd.f32 0.0, %v839
        %841 = vmatmul.bf16.gmra.mxu0 %v761
        %v842 = vpop.f32.mrf.mxu0
        %v843 = vadd.f32 0.0, %v842
        %v844 = vpop.f32.mrf.mxu0
        %v845 = vadd.f32 0.0, %v844
        %846 = vmatmul.bf16.gmra.mxu0 %v762
        %v847 = vpop.f32.mrf.mxu0
        %v848 = vadd.f32 0.0, %v847
        %v849 = vpop.f32.mrf.mxu0
        %v850 = vadd.f32 0.0, %v849
        %851 = vmatmul.bf16.gmra.mxu0 %v763
        %v852 = vpop.f32.mrf.mxu0
        %v853 = vadd.f32 0.0, %v852
        %v854 = vpop.f32.mrf.mxu0
        %v855 = vadd.f32 0.0, %v854
        %856 = vmatmul.bf16.gmra.mxu0 %v764
        %v857 = vpop.f32.mrf.mxu0
        %v858 = vadd.f32 0.0, %v857
        %v859 = vpop.f32.mrf.mxu0
        %v860 = vadd.f32 0.0, %v859
        %861 = vmatmul.bf16.gmra.mxu0 %v765
        %v862 = vpop.f32.mrf.mxu0
        %v863 = vadd.f32 0.0, %v862
        %v864 = vpop.f32.mrf.mxu0
        %v865 = vadd.f32 0.0, %v864
        %866 = vmatmul.bf16.gmra.mxu0 %v766
        %v867 = vpop.f32.mrf.mxu0
        %v868 = vadd.f32 0.0, %v867
        %v869 = vpop.f32.mrf.mxu0
        %v870 = vadd.f32 0.0, %v869
        %871 = vdwg.mxu0
        %v872 = vld [vmem:[%s3] sm:$0xff]
        %v873 = vld [vmem:[%s3 + $0x8] sm:$0xff]
        %v874 = vld [vmem:[%s3 + $0x10] sm:$0xff]
        %v875 = vld [vmem:[%s3 + $0x18] sm:$0xff]
        %v876 = vld [vmem:[%s3 + $0x20] sm:$0xff]
        %v877 = vld [vmem:[%s3 + $0x28] sm:$0xff]
        %v878 = vld [vmem:[%s3 + $0x30] sm:$0xff]
        %v879 = vld [vmem:[%s3 + $0x38] sm:$0xff]
        %v880 = vld [vmem:[%s3 + $0x40] sm:$0xff]
        %v881 = vld [vmem:[%s3 + $0x48] sm:$0xff]
        %v882 = vld [vmem:[%s3 + $0x50] sm:$0xff]
        %v883 = vld [vmem:[%s3 + $0x58] sm:$0xff]
        %v884 = vld [vmem:[%s3 + $0x60] sm:$0xff]
        %v885 = vld [vmem:[%s3 + $0x68] sm:$0xff]
        %v886 = vld [vmem:[%s3 + $0x70] sm:$0xff]
        %v887 = vld [vmem:[%s3 + $0x78] sm:$0xff]
        %888 = vmatpush.msra.mxu0 %v887
        %889 = vmatpush.msra.mxu0 %v886
        %890 = vmatpush.msra.mxu0 %v885
        %891 = vmatpush.msra.mxu0 %v884
        %892 = vmatpush.msra.mxu0 %v883
        %893 = vmatpush.msra.mxu0 %v882
        %894 = vmatpush.msra.mxu0 %v881
        %895 = vmatpush.msra.mxu0 %v880
        %896 = vmatpush.msra.mxu0 %v879
        %897 = vmatpush.msra.mxu0 %v878
        %898 = vmatpush.msra.mxu0 %v877
        %899 = vmatpush.msra.mxu0 %v876
        %900 = vmatpush.msra.mxu0 %v875
        %901 = vmatpush.msra.mxu0 %v874
        %902 = vmatpush.msra.mxu0 %v873
        %903 = vmatpush.msra.mxu0 %v872
        %904 = vmatmul.f32.gmra.mxu0 %v833
        %v905 = vpop.f32.mrf.mxu0
        %v906 = vadd.f32 0.0, %v905
        %907 = vmatmul.f32.gmra.mxu0 %v835
        %v908 = vpop.f32.mrf.mxu0
        %v909 = vadd.f32 0.0, %v908
        %910 = vmatmul.f32.gmra.mxu0 %v838
        %v911 = vpop.f32.mrf.mxu0
        %v912 = vadd.f32 0.0, %v911
        %913 = vmatmul.f32.gmra.mxu0 %v840
        %v914 = vpop.f32.mrf.mxu0
        %v915 = vadd.f32 0.0, %v914
        %916 = vmatmul.f32.gmra.mxu0 %v843
        %v917 = vpop.f32.mrf.mxu0
        %v918 = vadd.f32 0.0, %v917
        %919 = vmatmul.f32.gmra.mxu0 %v845
        %v920 = vpop.f32.mrf.mxu0
        %v921 = vadd.f32 0.0, %v920
        %922 = vmatmul.f32.gmra.mxu0 %v848
        %v923 = vpop.f32.mrf.mxu0
        %v924 = vadd.f32 0.0, %v923
        %925 = vmatmul.f32.gmra.mxu0 %v850
        %v926 = vpop.f32.mrf.mxu0
        %v927 = vadd.f32 0.0, %v926
        %928 = vmatmul.f32.gmra.mxu0 %v853
        %v929 = vpop.f32.mrf.mxu0
        %v930 = vadd.f32 0.0, %v929
        %931 = vmatmul.f32.gmra.mxu0 %v855
        %v932 = vpop.f32.mrf.mxu0
        %v933 = vadd.f32 0.0, %v932
        %934 = vmatmul.f32.gmra.mxu0 %v858
        %v935 = vpop.f32.mrf.mxu0
        %v936 = vadd.f32 0.0, %v935
        %937 = vmatmul.f32.gmra.mxu0 %v860
        %v938 = vpop.f32.mrf.mxu0
        %v939 = vadd.f32 0.0, %v938
        %940 = vmatmul.f32.gmra.mxu0 %v863
        %v941 = vpop.f32.mrf.mxu0
        %v942 = vadd.f32 0.0, %v941
        %943 = vmatmul.f32.gmra.mxu0 %v865
        %v944 = vpop.f32.mrf.mxu0
        %v945 = vadd.f32 0.0, %v944
        %946 = vmatmul.f32.gmra.mxu0 %v868
        %v947 = vpop.f32.mrf.mxu0
        %v948 = vadd.f32 0.0, %v947
        %949 = vmatmul.f32.gmra.mxu0 %v870
        %v950 = vpop.f32.mrf.mxu0
        %v951 = vadd.f32 0.0, %v950
        %952 = vdwg.mxu0
        %953 = vxpose.xlu0.b32.start [1/16] %v906, 128
        %954 = vxpose.xlu0.b32.cont [2/16] %v909, 128
        %955 = vxpose.xlu0.b32.cont [3/16] %v912, 128
        %956 = vxpose.xlu0.b32.cont [4/16] %v915, 128
        %957 = vxpose.xlu0.b32.cont [5/16] %v918, 128
        %958 = vxpose.xlu0.b32.cont [6/16] %v921, 128
        %959 = vxpose.xlu0.b32.cont [7/16] %v924, 128
        %960 = vxpose.xlu0.b32.cont [8/16] %v927, 128
        %961 = vxpose.xlu0.b32.cont [9/16] %v930, 128
        %962 = vxpose.xlu0.b32.cont [10/16] %v933, 128
        %963 = vxpose.xlu0.b32.cont [11/16] %v936, 128
        %964 = vxpose.xlu0.b32.cont [12/16] %v939, 128
        %965 = vxpose.xlu0.b32.cont [13/16] %v942, 128
        %966 = vxpose.xlu0.b32.cont [14/16] %v945, 128
        %967 = vxpose.xlu0.b32.cont [15/16] %v948, 128
        %968 = vxpose.xlu0.b32.end [16/16] %v951, 128
        %v969 = vpop.trf.xlu0
        %v970 = vpop.trf.xlu0
        %v971 = vpop.trf.xlu0
        %v972 = vpop.trf.xlu0
        %v973 = vpop.trf.xlu0
        %v974 = vpop.trf.xlu0
        %v975 = vpop.trf.xlu0
        %v976 = vpop.trf.xlu0
        %v977 = vpop.trf.xlu0
        %v978 = vpop.trf.xlu0
        %v979 = vpop.trf.xlu0
        %v980 = vpop.trf.xlu0
        %v981 = vpop.trf.xlu0
        %v982 = vpop.trf.xlu0
        %v983 = vpop.trf.xlu0
        %v984 = vpop.trf.xlu0
        %v985 = vpack.c.bf16 %v833, %v833
        %v986 = vpack.c.bf16 %v835, %v835
        %v987 = vpack.c.bf16 %v838, %v838
        %v988 = vpack.c.bf16 %v840, %v840
        %v989 = vpack.c.bf16 %v843, %v843
        %v990 = vpack.c.bf16 %v845, %v845
        %v991 = vpack.c.bf16 %v848, %v848
        %v992 = vpack.c.bf16 %v850, %v850
        %v993 = vpack.c.bf16 %v853, %v853
        %v994 = vpack.c.bf16 %v855, %v855
        %v995 = vpack.c.bf16 %v858, %v858
        %v996 = vpack.c.bf16 %v860, %v860
        %v997 = vpack.c.bf16 %v863, %v863
        %v998 = vpack.c.bf16 %v865, %v865
        %v999 = vpack.c.bf16 %v868, %v868
        %v1000 = vpack.c.bf16 %v870, %v870
        %v1001 = vld [vmem:[%s426] sm:$0xf]
        %v1002 = vld [vmem:[%s426 + $0x4] sm:$0xf]
        %v1003 = vld [vmem:[%s426 + $0x8] sm:$0xf]
        %v1004 = vld [vmem:[%s426 + $0xc] sm:$0xf]
        %v1005 = vld [vmem:[%s426 + $0x10] sm:$0xf]
        %v1006 = vld [vmem:[%s426 + $0x14] sm:$0xf]
        %v1007 = vld [vmem:[%s426 + $0x18] sm:$0xf]
        %v1008 = vld [vmem:[%s426 + $0x1c] sm:$0xf]
        %v1009 = vunpack.c.l.bf16 %v1001
        %v1010 = vunpack.c.l.bf16 %v1002
        %v1011 = vunpack.c.l.bf16 %v1003
        %v1012 = vunpack.c.l.bf16 %v1004
        %v1013 = vunpack.c.l.bf16 %v1005
        %v1014 = vunpack.c.l.bf16 %v1006
        %v1015 = vunpack.c.l.bf16 %v1007
        %v1016 = vunpack.c.l.bf16 %v1008
        %v1017 = vsub.f32 %v1009, 1.0
        %v1018 = vsub.f32 %v1010, 1.0
        %v1019 = vsub.f32 %v1011, 1.0
        %v1020 = vsub.f32 %v1012, 1.0
        %v1021 = vsub.f32 %v1013, 1.0
        %v1022 = vsub.f32 %v1014, 1.0
        %v1023 = vsub.f32 %v1015, 1.0
        %v1024 = vsub.f32 %v1016, 1.0
        %v1025 = vmul.f32 %v1017, 1e+30
        %v1026 = vmul.f32 %v1018, 1e+30
        %v1027 = vmul.f32 %v1019, 1e+30
        %v1028 = vmul.f32 %v1020, 1e+30
        %v1029 = vmul.f32 %v1021, 1e+30
        %v1030 = vmul.f32 %v1022, 1e+30
        %v1031 = vmul.f32 %v1023, 1e+30
        %v1032 = vmul.f32 %v1024, 1e+30
        %v1033 = vld [vmem:[#allocation2] sm:$0xff]
        %v1034 = vld [vmem:[#allocation2 + $0x8] sm:$0xff]
        %v1035 = vld [vmem:[#allocation2 + $0x10] sm:$0xff]
        %v1036 = vld [vmem:[#allocation2 + $0x18] sm:$0xff]
        %v1037 = vld [vmem:[#allocation2 + $0x20] sm:$0xff]
        %v1038 = vld [vmem:[#allocation2 + $0x28] sm:$0xff]
        %v1039 = vld [vmem:[#allocation2 + $0x30] sm:$0xff]
        %v1040 = vld [vmem:[#allocation2 + $0x38] sm:$0xff]
        %v1041 = vld [vmem:[#allocation3] sm:$0xff]
        %v1042 = vld [vmem:[#allocation3 + $0x8] sm:$0xff]
        %v1043 = vld [vmem:[#allocation3 + $0x10] sm:$0xff]
        %v1044 = vld [vmem:[#allocation3 + $0x18] sm:$0xff]
        %v1045 = vld [vmem:[#allocation3 + $0x20] sm:$0xff]
        %v1046 = vld [vmem:[#allocation3 + $0x28] sm:$0xff]
        %v1047 = vld [vmem:[#allocation3 + $0x30] sm:$0xff]
        %v1048 = vld [vmem:[#allocation3 + $0x38] sm:$0xff]
        %v1049 = vld [vmem:[#allocation4] sm:$0xff]
        %v1050 = vld [vmem:[#allocation4 + $0x8] sm:$0xff]
        %v1051 = vld [vmem:[#allocation4 + $0x10] sm:$0xff]
        %v1052 = vld [vmem:[#allocation4 + $0x18] sm:$0xff]
        %v1053 = vld [vmem:[#allocation4 + $0x20] sm:$0xff]
        %v1054 = vld [vmem:[#allocation4 + $0x28] sm:$0xff]
        %v1055 = vld [vmem:[#allocation4 + $0x30] sm:$0xff]
        %v1056 = vld [vmem:[#allocation4 + $0x38] sm:$0xff]
        %v1057 = vld [vmem:[#allocation5] sm:$0xff]
        %v1058 = vld [vmem:[#allocation5 + $0x8] sm:$0xff]
        %v1059 = vld [vmem:[#allocation5 + $0x10] sm:$0xff]
        %v1060 = vld [vmem:[#allocation5 + $0x18] sm:$0xff]
        %v1061 = vld [vmem:[#allocation5 + $0x20] sm:$0xff]
        %v1062 = vld [vmem:[#allocation5 + $0x28] sm:$0xff]
        %v1063 = vld [vmem:[#allocation5 + $0x30] sm:$0xff]
        %v1064 = vld [vmem:[#allocation5 + $0x38] sm:$0xff]
        %1066 = vset.pattern.permute.xlu0 0
        %1067 = vperm.xlu0 %1066, %v1033
        %v1068 = vpop.permute.xlu0 %1067
        %1071 = vset.pattern.permute.xlu0 0
        %1072 = vperm.xlu0 %1071, %v1034
        %v1073 = vpop.permute.xlu0 %1072
        %1076 = vset.pattern.permute.xlu0 0
        %1077 = vperm.xlu0 %1076, %v1035
        %v1078 = vpop.permute.xlu0 %1077
        %1081 = vset.pattern.permute.xlu0 0
        %1082 = vperm.xlu0 %1081, %v1036
        %v1083 = vpop.permute.xlu0 %1082
        %1086 = vset.pattern.permute.xlu0 0
        %1087 = vperm.xlu0 %1086, %v1037
        %v1088 = vpop.permute.xlu0 %1087
        %1091 = vset.pattern.permute.xlu0 0
        %1092 = vperm.xlu0 %1091, %v1038
        %v1093 = vpop.permute.xlu0 %1092
        %1096 = vset.pattern.permute.xlu0 0
        %1097 = vperm.xlu0 %1096, %v1039
        %v1098 = vpop.permute.xlu0 %1097
        %1101 = vset.pattern.permute.xlu0 0
        %1102 = vperm.xlu0 %1101, %v1040
        %v1103 = vpop.permute.xlu0 %1102
        %v1105 = vperm.slane %v969, 0
        %v1106 = vadd.f32 %v1068, %v1105
        %v1107 = vadd.f32 %v1073, %v1105
        %v1108 = vadd.f32 %v1078, %v1105
        %v1109 = vadd.f32 %v1083, %v1105
        %v1110 = vadd.f32 %v1088, %v1105
        %v1111 = vadd.f32 %v1093, %v1105
        %v1112 = vadd.f32 %v1098, %v1105
        %v1113 = vadd.f32 %v1103, %v1105
        %vm1114 = vcmp.gt.f32.partialorder %v1106, 0.0
        %vm1115 = vcmp.gt.f32.partialorder %v1107, 0.0
        %vm1116 = vcmp.gt.f32.partialorder %v1108, 0.0
        %vm1117 = vcmp.gt.f32.partialorder %v1109, 0.0
        %vm1118 = vcmp.gt.f32.partialorder %v1110, 0.0
        %vm1119 = vcmp.gt.f32.partialorder %v1111, 0.0
        %vm1120 = vcmp.gt.f32.partialorder %v1112, 0.0
        %vm1121 = vcmp.gt.f32.partialorder %v1113, 0.0
        %v1122 = vmul.f32 %v1106, 0.2
        %v1123 = vmul.f32 %v1107, 0.2
        %v1124 = vmul.f32 %v1108, 0.2
        %v1125 = vmul.f32 %v1109, 0.2
        %v1126 = vmul.f32 %v1110, 0.2
        %v1127 = vmul.f32 %v1111, 0.2
        %v1128 = vmul.f32 %v1112, 0.2
        %v1129 = vmul.f32 %v1113, 0.2
        %v1130 = vsel %vm1114, %v1106, %v1122
        %v1131 = vsel %vm1115, %v1107, %v1123
        %v1132 = vsel %vm1116, %v1108, %v1124
        %v1133 = vsel %vm1117, %v1109, %v1125
        %v1134 = vsel %vm1118, %v1110, %v1126
        %v1135 = vsel %vm1119, %v1111, %v1127
        %v1136 = vsel %vm1120, %v1112, %v1128
        %v1137 = vsel %vm1121, %v1113, %v1129
        %v1138 = vadd.f32 %v1130, %v1025
        %v1139 = vadd.f32 %v1131, %v1026
        %v1140 = vadd.f32 %v1132, %v1027
        %v1141 = vadd.f32 %v1133, %v1028
        %v1142 = vadd.f32 %v1134, %v1029
        %v1143 = vadd.f32 %v1135, %v1030
        %v1144 = vadd.f32 %v1136, %v1031
        %v1145 = vadd.f32 %v1137, %v1032
        %1146 = vmax.xlane.f32.xlu0 %v1138
        %v1147 = vpop.xlane.xlu0 %1146
        %1148 = vmax.xlane.f32.xlu0 %v1139
        %v1149 = vpop.xlane.xlu0 %1148
        %1150 = vmax.xlane.f32.xlu0 %v1140
        %v1151 = vpop.xlane.xlu0 %1150
        %1152 = vmax.xlane.f32.xlu0 %v1141
        %v1153 = vpop.xlane.xlu0 %1152
        %1154 = vmax.xlane.f32.xlu0 %v1142
        %v1155 = vpop.xlane.xlu0 %1154
        %1156 = vmax.xlane.f32.xlu0 %v1143
        %v1157 = vpop.xlane.xlu0 %1156
        %1158 = vmax.xlane.f32.xlu0 %v1144
        %v1159 = vpop.xlane.xlu0 %1158
        %1160 = vmax.xlane.f32.xlu0 %v1145
        %v1161 = vpop.xlane.xlu0 %1160
        %v1162 = vmax.f32 %v1041, %v1147
        %v1163 = vmax.f32 %v1042, %v1149
        %v1164 = vmax.f32 %v1043, %v1151
        %v1165 = vmax.f32 %v1044, %v1153
        %v1166 = vmax.f32 %v1045, %v1155
        %v1167 = vmax.f32 %v1046, %v1157
        %v1168 = vmax.f32 %v1047, %v1159
        %v1169 = vmax.f32 %v1048, %v1161
        %v1170 = vsub.f32 %v1041, %v1162
        %v1171 = vsub.f32 %v1042, %v1163
        %v1172 = vsub.f32 %v1043, %v1164
        %v1173 = vsub.f32 %v1044, %v1165
        %v1174 = vsub.f32 %v1045, %v1166
        %v1175 = vsub.f32 %v1046, %v1167
        %v1176 = vsub.f32 %v1047, %v1168
        %v1177 = vsub.f32 %v1048, %v1169
        %v1178 = vmul.f32 %v1170, 1.442695
        %v1179 = vpow.pop %v1178
        %v1180 = vmul.f32 %v1171, 1.442695
        %v1181 = vpow.pop %v1180
        %v1182 = vmul.f32 %v1172, 1.442695
        %v1183 = vpow.pop %v1182
        %v1184 = vmul.f32 %v1173, 1.442695
        %v1185 = vpow.pop %v1184
        %v1186 = vmul.f32 %v1174, 1.442695
        %v1187 = vpow.pop %v1186
        %v1188 = vmul.f32 %v1175, 1.442695
        %v1189 = vpow.pop %v1188
        %v1190 = vmul.f32 %v1176, 1.442695
        %v1191 = vpow.pop %v1190
        %v1192 = vmul.f32 %v1177, 1.442695
        %v1193 = vpow.pop %v1192
        %1195 = vset.pattern.permute.xlu0 0
        %1196 = vperm.xlu0 %1195, %v1162
        %v1197 = vpop.permute.xlu0 %1196
        %1200 = vset.pattern.permute.xlu0 0
        %1201 = vperm.xlu0 %1200, %v1163
        %v1202 = vpop.permute.xlu0 %1201
        %1205 = vset.pattern.permute.xlu0 0
        %1206 = vperm.xlu0 %1205, %v1164
        %v1207 = vpop.permute.xlu0 %1206
        %1210 = vset.pattern.permute.xlu0 0
        %1211 = vperm.xlu0 %1210, %v1165
        %v1212 = vpop.permute.xlu0 %1211
        %1215 = vset.pattern.permute.xlu0 0
        %1216 = vperm.xlu0 %1215, %v1166
        %v1217 = vpop.permute.xlu0 %1216
        %1220 = vset.pattern.permute.xlu0 0
        %1221 = vperm.xlu0 %1220, %v1167
        %v1222 = vpop.permute.xlu0 %1221
        %1225 = vset.pattern.permute.xlu0 0
        %1226 = vperm.xlu0 %1225, %v1168
        %v1227 = vpop.permute.xlu0 %1226
        %1230 = vset.pattern.permute.xlu0 0
        %1231 = vperm.xlu0 %1230, %v1169
        %v1232 = vpop.permute.xlu0 %1231
        %v1234 = vsub.f32 %v1138, %v1197
        %v1235 = vsub.f32 %v1139, %v1202
        %v1236 = vsub.f32 %v1140, %v1207
        %v1237 = vsub.f32 %v1141, %v1212
        %v1238 = vsub.f32 %v1142, %v1217
        %v1239 = vsub.f32 %v1143, %v1222
        %v1240 = vsub.f32 %v1144, %v1227
        %v1241 = vsub.f32 %v1145, %v1232
        %v1242 = vmul.f32 %v1234, 1.442695
        %v1243 = vpow.pop %v1242
        %v1244 = vmul.f32 %v1235, 1.442695
        %v1245 = vpow.pop %v1244
        %v1246 = vmul.f32 %v1236, 1.442695
        %v1247 = vpow.pop %v1246
        %v1248 = vmul.f32 %v1237, 1.442695
        %v1249 = vpow.pop %v1248
        %v1250 = vmul.f32 %v1238, 1.442695
        %v1251 = vpow.pop %v1250
        %v1252 = vmul.f32 %v1239, 1.442695
        %v1253 = vpow.pop %v1252
        %v1254 = vmul.f32 %v1240, 1.442695
        %v1255 = vpow.pop %v1254
        %v1256 = vmul.f32 %v1241, 1.442695
        %v1257 = vpow.pop %v1256
        %v1258 = vmul.f32 %v1243, %v1009
        %v1259 = vmul.f32 %v1245, %v1010
        %v1260 = vmul.f32 %v1247, %v1011
        %v1261 = vmul.f32 %v1249, %v1012
        %v1262 = vmul.f32 %v1251, %v1013
        %v1263 = vmul.f32 %v1253, %v1014
        %v1264 = vmul.f32 %v1255, %v1015
        %v1265 = vmul.f32 %v1257, %v1016
        %v1266 = vmul.f32 %v1179, %v1049
        %v1267 = vmul.f32 %v1181, %v1050
        %v1268 = vmul.f32 %v1183, %v1051
        %v1269 = vmul.f32 %v1185, %v1052
        %v1270 = vmul.f32 %v1187, %v1053
        %v1271 = vmul.f32 %v1189, %v1054
        %v1272 = vmul.f32 %v1191, %v1055
        %v1273 = vmul.f32 %v1193, %v1056
        %1274 = vadd.xlane.f32.xlu0 %v1258
        %v1275 = vpop.xlane.xlu0 %1274
        %1276 = vadd.xlane.f32.xlu0 %v1259
        %v1277 = vpop.xlane.xlu0 %1276
        %1278 = vadd.xlane.f32.xlu0 %v1260
        %v1279 = vpop.xlane.xlu0 %1278
        %1280 = vadd.xlane.f32.xlu0 %v1261
        %v1281 = vpop.xlane.xlu0 %1280
        %1282 = vadd.xlane.f32.xlu0 %v1262
        %v1283 = vpop.xlane.xlu0 %1282
        %1284 = vadd.xlane.f32.xlu0 %v1263
        %v1285 = vpop.xlane.xlu0 %1284
        %1286 = vadd.xlane.f32.xlu0 %v1264
        %v1287 = vpop.xlane.xlu0 %1286
        %1288 = vadd.xlane.f32.xlu0 %v1265
        %v1289 = vpop.xlane.xlu0 %1288
        %v1290 = vadd.f32 %v1266, %v1275
        %v1291 = vadd.f32 %v1267, %v1277
        %v1292 = vadd.f32 %v1268, %v1279
        %v1293 = vadd.f32 %v1269, %v1281
        %v1294 = vadd.f32 %v1270, %v1283
        %v1295 = vadd.f32 %v1271, %v1285
        %v1296 = vadd.f32 %v1272, %v1287
        %v1297 = vadd.f32 %v1273, %v1289
        %v1298 = vpack.c.bf16 %v1259, %v1258
        %v1299 = vpack.c.bf16 %v1261, %v1260
        %v1300 = vpack.c.bf16 %v1263, %v1262
        %v1301 = vpack.c.bf16 %v1265, %v1264
        %v1318 = vunpack.c.l.b16 %v985
        %v1319 = vunpack.c.l.b16 %v986
        %v1320 = vunpack.c.l.b16 %v987
        %v1321 = vunpack.c.l.b16 %v988
        %v1322 = vunpack.c.l.b16 %v989
        %v1323 = vunpack.c.l.b16 %v990
        %v1324 = vunpack.c.l.b16 %v991
        %v1325 = vunpack.c.l.b16 %v992
        %v1326 = vunpack.c.l.b16 %v993
        %v1327 = vunpack.c.l.b16 %v994
        %v1328 = vunpack.c.l.b16 %v995
        %v1329 = vunpack.c.l.b16 %v996
        %v1330 = vunpack.c.l.b16 %v997
        %v1331 = vunpack.c.l.b16 %v998
        %v1332 = vunpack.c.l.b16 %v999
        %v1333 = vunpack.c.l.b16 %v1000
        %v1334 = vpack.c.b16 %v1319, %v1318
        %v1335 = vpack.c.b16 %v1321, %v1320
        %v1336 = vpack.c.b16 %v1323, %v1322
        %v1337 = vpack.c.b16 %v1325, %v1324
        %v1338 = vpack.c.b16 %v1327, %v1326
        %v1339 = vpack.c.b16 %v1329, %v1328
        %v1340 = vpack.c.b16 %v1331, %v1330
        %v1341 = vpack.c.b16 %v1333, %v1332
        %1350 = vmatpush.bf16.msra.mxu0 %v1341
        %1351 = vmatpush.bf16.msra.mxu0 %v1340
        %1352 = vmatpush.bf16.msra.mxu0 %v1339
        %1353 = vmatpush.bf16.msra.mxu0 %v1338
        %1354 = vmatpush.bf16.msra.mxu0 %v1337
        %1355 = vmatpush.bf16.msra.mxu0 %v1336
        %1356 = vmatpush.bf16.msra.mxu0 %v1335
        %1357 = vmatpush.bf16.msra.mxu0 %v1334
        %1358 = vmatmul.bf16.gmra.mxu0 %v1298
        %v1359 = vpop.f32.mrf.mxu0
        %v1360 = vadd.f32 0.0, %v1359
        %v1361 = vpop.f32.mrf.mxu0
        %v1362 = vadd.f32 0.0, %v1361
        %1363 = vmatmul.bf16.gmra.mxu0 %v1299
        %v1364 = vpop.f32.mrf.mxu0
        %v1365 = vadd.f32 0.0, %v1364
        %v1366 = vpop.f32.mrf.mxu0
        %v1367 = vadd.f32 0.0, %v1366
        %1368 = vmatmul.bf16.gmra.mxu0 %v1300
        %v1369 = vpop.f32.mrf.mxu0
        %v1370 = vadd.f32 0.0, %v1369
        %v1371 = vpop.f32.mrf.mxu0
        %v1372 = vadd.f32 0.0, %v1371
        %1373 = vmatmul.bf16.gmra.mxu0 %v1301
        %v1374 = vpop.f32.mrf.mxu0
        %v1375 = vadd.f32 0.0, %v1374
        %v1376 = vpop.f32.mrf.mxu0
        %v1377 = vadd.f32 0.0, %v1376
        %1378 = vdwg.mxu0
        %1380 = vset.pattern.permute.xlu0 0
        %1381 = vperm.xlu0 %1380, %v1179
        %v1382 = vpop.permute.xlu0 %1381
        %1385 = vset.pattern.permute.xlu0 0
        %1386 = vperm.xlu0 %1385, %v1181
        %v1387 = vpop.permute.xlu0 %1386
        %1390 = vset.pattern.permute.xlu0 0
        %1391 = vperm.xlu0 %1390, %v1183
        %v1392 = vpop.permute.xlu0 %1391
        %1395 = vset.pattern.permute.xlu0 0
        %1396 = vperm.xlu0 %1395, %v1185
        %v1397 = vpop.permute.xlu0 %1396
        %1400 = vset.pattern.permute.xlu0 0
        %1401 = vperm.xlu0 %1400, %v1187
        %v1402 = vpop.permute.xlu0 %1401
        %1405 = vset.pattern.permute.xlu0 0
        %1406 = vperm.xlu0 %1405, %v1189
        %v1407 = vpop.permute.xlu0 %1406
        %1410 = vset.pattern.permute.xlu0 0
        %1411 = vperm.xlu0 %1410, %v1191
        %v1412 = vpop.permute.xlu0 %1411
        %1415 = vset.pattern.permute.xlu0 0
        %1416 = vperm.xlu0 %1415, %v1193
        %v1417 = vpop.permute.xlu0 %1416
        %1419 = vset.pattern.permute.xlu0 1
        %1420 = vperm.xlu0 %1419, %v1033
        %v1421 = vpop.permute.xlu0 %1420
        %1423 = vset.pattern.permute.xlu0 1
        %1424 = vperm.xlu0 %1423, %v1034
        %v1425 = vpop.permute.xlu0 %1424
        %1427 = vset.pattern.permute.xlu0 1
        %1428 = vperm.xlu0 %1427, %v1035
        %v1429 = vpop.permute.xlu0 %1428
        %1431 = vset.pattern.permute.xlu0 1
        %1432 = vperm.xlu0 %1431, %v1036
        %v1433 = vpop.permute.xlu0 %1432
        %1435 = vset.pattern.permute.xlu0 1
        %1436 = vperm.xlu0 %1435, %v1037
        %v1437 = vpop.permute.xlu0 %1436
        %1439 = vset.pattern.permute.xlu0 1
        %1440 = vperm.xlu0 %1439, %v1038
        %v1441 = vpop.permute.xlu0 %1440
        %1443 = vset.pattern.permute.xlu0 1
        %1444 = vperm.xlu0 %1443, %v1039
        %v1445 = vpop.permute.xlu0 %1444
        %1447 = vset.pattern.permute.xlu0 1
        %1448 = vperm.xlu0 %1447, %v1040
        %v1449 = vpop.permute.xlu0 %1448
        %v1451 = vperm.slane %v969, 1
        %v1452 = vadd.f32 %v1421, %v1451
        %v1453 = vadd.f32 %v1425, %v1451
        %v1454 = vadd.f32 %v1429, %v1451
        %v1455 = vadd.f32 %v1433, %v1451
        %v1456 = vadd.f32 %v1437, %v1451
        %v1457 = vadd.f32 %v1441, %v1451
        %v1458 = vadd.f32 %v1445, %v1451
        %v1459 = vadd.f32 %v1449, %v1451
        %vm1460 = vcmp.gt.f32.partialorder %v1452, 0.0
        %vm1461 = vcmp.gt.f32.partialorder %v1453, 0.0
        %vm1462 = vcmp.gt.f32.partialorder %v1454, 0.0
        %vm1463 = vcmp.gt.f32.partialorder %v1455, 0.0
        %vm1464 = vcmp.gt.f32.partialorder %v1456, 0.0
        %vm1465 = vcmp.gt.f32.partialorder %v1457, 0.0
        %vm1466 = vcmp.gt.f32.partialorder %v1458, 0.0
        %vm1467 = vcmp.gt.f32.partialorder %v1459, 0.0
        %v1468 = vmul.f32 %v1452, 0.2
        %v1469 = vmul.f32 %v1453, 0.2
        %v1470 = vmul.f32 %v1454, 0.2
        %v1471 = vmul.f32 %v1455, 0.2
        %v1472 = vmul.f32 %v1456, 0.2
        %v1473 = vmul.f32 %v1457, 0.2
        %v1474 = vmul.f32 %v1458, 0.2
        %v1475 = vmul.f32 %v1459, 0.2
        %v1476 = vsel %vm1460, %v1452, %v1468
        %v1477 = vsel %vm1461, %v1453, %v1469
        %v1478 = vsel %vm1462, %v1454, %v1470
        %v1479 = vsel %vm1463, %v1455, %v1471
        %v1480 = vsel %vm1464, %v1456, %v1472
        %v1481 = vsel %vm1465, %v1457, %v1473
        %v1482 = vsel %vm1466, %v1458, %v1474
        %v1483 = vsel %vm1467, %v1459, %v1475
        %v1484 = vadd.f32 %v1476, %v1025
        %v1485 = vadd.f32 %v1477, %v1026
        %v1486 = vadd.f32 %v1478, %v1027
        %v1487 = vadd.f32 %v1479, %v1028
        %v1488 = vadd.f32 %v1480, %v1029
        %v1489 = vadd.f32 %v1481, %v1030
        %v1490 = vadd.f32 %v1482, %v1031
        %v1491 = vadd.f32 %v1483, %v1032
        %1492 = vmax.xlane.f32.xlu0 %v1484
        %v1493 = vpop.xlane.xlu0 %1492
        %1494 = vmax.xlane.f32.xlu0 %v1485
        %v1495 = vpop.xlane.xlu0 %1494
        %1496 = vmax.xlane.f32.xlu0 %v1486
        %v1497 = vpop.xlane.xlu0 %1496
        %1498 = vmax.xlane.f32.xlu0 %v1487
        %v1499 = vpop.xlane.xlu0 %1498
        %1500 = vmax.xlane.f32.xlu0 %v1488
        %v1501 = vpop.xlane.xlu0 %1500
        %1502 = vmax.xlane.f32.xlu0 %v1489
        %v1503 = vpop.xlane.xlu0 %1502
        %1504 = vmax.xlane.f32.xlu0 %v1490
        %v1505 = vpop.xlane.xlu0 %1504
        %1506 = vmax.xlane.f32.xlu0 %v1491
        %v1507 = vpop.xlane.xlu0 %1506
        %v1508 = vmax.f32 %v1041, %v1493
        %v1509 = vmax.f32 %v1042, %v1495
        %v1510 = vmax.f32 %v1043, %v1497
        %v1511 = vmax.f32 %v1044, %v1499
        %v1512 = vmax.f32 %v1045, %v1501
        %v1513 = vmax.f32 %v1046, %v1503
        %v1514 = vmax.f32 %v1047, %v1505
        %v1515 = vmax.f32 %v1048, %v1507
        %v1516 = vsub.f32 %v1041, %v1508
        %v1517 = vsub.f32 %v1042, %v1509
        %v1518 = vsub.f32 %v1043, %v1510
        %v1519 = vsub.f32 %v1044, %v1511
        %v1520 = vsub.f32 %v1045, %v1512
        %v1521 = vsub.f32 %v1046, %v1513
        %v1522 = vsub.f32 %v1047, %v1514
        %v1523 = vsub.f32 %v1048, %v1515
        %v1524 = vmul.f32 %v1516, 1.442695
        %v1525 = vpow.pop %v1524
        %v1526 = vmul.f32 %v1517, 1.442695
        %v1527 = vpow.pop %v1526
        %v1528 = vmul.f32 %v1518, 1.442695
        %v1529 = vpow.pop %v1528
        %v1530 = vmul.f32 %v1519, 1.442695
        %v1531 = vpow.pop %v1530
        %v1532 = vmul.f32 %v1520, 1.442695
        %v1533 = vpow.pop %v1532
        %v1534 = vmul.f32 %v1521, 1.442695
        %v1535 = vpow.pop %v1534
        %v1536 = vmul.f32 %v1522, 1.442695
        %v1537 = vpow.pop %v1536
        %v1538 = vmul.f32 %v1523, 1.442695
        %v1539 = vpow.pop %v1538
        %1541 = vset.pattern.permute.xlu0 1
        %1542 = vperm.xlu0 %1541, %v1508
        %v1543 = vpop.permute.xlu0 %1542
        %1546 = vset.pattern.permute.xlu0 1
        %1547 = vperm.xlu0 %1546, %v1509
        %v1548 = vpop.permute.xlu0 %1547
        %1551 = vset.pattern.permute.xlu0 1
        %1552 = vperm.xlu0 %1551, %v1510
        %v1553 = vpop.permute.xlu0 %1552
        %1556 = vset.pattern.permute.xlu0 1
        %1557 = vperm.xlu0 %1556, %v1511
        %v1558 = vpop.permute.xlu0 %1557
        %1561 = vset.pattern.permute.xlu0 1
        %1562 = vperm.xlu0 %1561, %v1512
        %v1563 = vpop.permute.xlu0 %1562
        %1566 = vset.pattern.permute.xlu0 1
        %1567 = vperm.xlu0 %1566, %v1513
        %v1568 = vpop.permute.xlu0 %1567
        %1571 = vset.pattern.permute.xlu0 1
        %1572 = vperm.xlu0 %1571, %v1514
        %v1573 = vpop.permute.xlu0 %1572
        %1576 = vset.pattern.permute.xlu0 1
        %1577 = vperm.xlu0 %1576, %v1515
        %v1578 = vpop.permute.xlu0 %1577
        %v1580 = vsub.f32 %v1484, %v1543
        %v1581 = vsub.f32 %v1485, %v1548
        %v1582 = vsub.f32 %v1486, %v1553
        %v1583 = vsub.f32 %v1487, %v1558
        %v1584 = vsub.f32 %v1488, %v1563
        %v1585 = vsub.f32 %v1489, %v1568
        %v1586 = vsub.f32 %v1490, %v1573
        %v1587 = vsub.f32 %v1491, %v1578
        %v1588 = vmul.f32 %v1580, 1.442695
        %v1589 = vpow.pop %v1588
        %v1590 = vmul.f32 %v1581, 1.442695
        %v1591 = vpow.pop %v1590
        %v1592 = vmul.f32 %v1582, 1.442695
        %v1593 = vpow.pop %v1592
        %v1594 = vmul.f32 %v1583, 1.442695
        %v1595 = vpow.pop %v1594
        %v1596 = vmul.f32 %v1584, 1.442695
        %v1597 = vpow.pop %v1596
        %v1598 = vmul.f32 %v1585, 1.442695
        %v1599 = vpow.pop %v1598
        %v1600 = vmul.f32 %v1586, 1.442695
        %v1601 = vpow.pop %v1600
        %v1602 = vmul.f32 %v1587, 1.442695
        %v1603 = vpow.pop %v1602
        %v1604 = vmul.f32 %v1589, %v1009
        %v1605 = vmul.f32 %v1591, %v1010
        %v1606 = vmul.f32 %v1593, %v1011
        %v1607 = vmul.f32 %v1595, %v1012
        %v1608 = vmul.f32 %v1597, %v1013
        %v1609 = vmul.f32 %v1599, %v1014
        %v1610 = vmul.f32 %v1601, %v1015
        %v1611 = vmul.f32 %v1603, %v1016
        %v1612 = vmul.f32 %v1525, %v1049
        %v1613 = vmul.f32 %v1527, %v1050
        %v1614 = vmul.f32 %v1529, %v1051
        %v1615 = vmul.f32 %v1531, %v1052
        %v1616 = vmul.f32 %v1533, %v1053
        %v1617 = vmul.f32 %v1535, %v1054
        %v1618 = vmul.f32 %v1537, %v1055
        %v1619 = vmul.f32 %v1539, %v1056
        %1620 = vadd.xlane.f32.xlu0 %v1604
        %v1621 = vpop.xlane.xlu0 %1620
        %1622 = vadd.xlane.f32.xlu0 %v1605
        %v1623 = vpop.xlane.xlu0 %1622
        %1624 = vadd.xlane.f32.xlu0 %v1606
        %v1625 = vpop.xlane.xlu0 %1624
        %1626 = vadd.xlane.f32.xlu0 %v1607
        %v1627 = vpop.xlane.xlu0 %1626
        %1628 = vadd.xlane.f32.xlu0 %v1608
        %v1629 = vpop.xlane.xlu0 %1628
        %1630 = vadd.xlane.f32.xlu0 %v1609
        %v1631 = vpop.xlane.xlu0 %1630
        %1632 = vadd.xlane.f32.xlu0 %v1610
        %v1633 = vpop.xlane.xlu0 %1632
        %1634 = vadd.xlane.f32.xlu0 %v1611
        %v1635 = vpop.xlane.xlu0 %1634
        %v1636 = vadd.f32 %v1612, %v1621
        %v1637 = vadd.f32 %v1613, %v1623
        %v1638 = vadd.f32 %v1614, %v1625
        %v1639 = vadd.f32 %v1615, %v1627
        %v1640 = vadd.f32 %v1616, %v1629
        %v1641 = vadd.f32 %v1617, %v1631
        %v1642 = vadd.f32 %v1618, %v1633
        %v1643 = vadd.f32 %v1619, %v1635
        %v1644 = vpack.c.bf16 %v1605, %v1604
        %v1645 = vpack.c.bf16 %v1607, %v1606
        %v1646 = vpack.c.bf16 %v1609, %v1608
        %v1647 = vpack.c.bf16 %v1611, %v1610
        %1648 = vrot.lane.b32.xlu0 %v1334, 120
        %v1649 = vpop.permute.xlu0 %1648
        %1650 = vrot.lane.b32.xlu0 %v1335, 120
        %v1651 = vpop.permute.xlu0 %1650
        %1652 = vrot.lane.b32.xlu0 %v1336, 120
        %v1653 = vpop.permute.xlu0 %1652
        %1654 = vrot.lane.b32.xlu0 %v1337, 120
        %v1655 = vpop.permute.xlu0 %1654
        %1656 = vrot.lane.b32.xlu0 %v1338, 120
        %v1657 = vpop.permute.xlu0 %1656
        %1658 = vrot.lane.b32.xlu0 %v1339, 120
        %v1659 = vpop.permute.xlu0 %1658
        %1660 = vrot.lane.b32.xlu0 %v1340, 120
        %v1661 = vpop.permute.xlu0 %1660
        %1662 = vrot.lane.b32.xlu0 %v1341, 120
        %v1663 = vpop.permute.xlu0 %1662
        %1672 = vmatpush.bf16.msra.mxu0 %v1663
        %1673 = vmatpush.bf16.msra.mxu0 %v1661
        %1674 = vmatpush.bf16.msra.mxu0 %v1659
        %1675 = vmatpush.bf16.msra.mxu0 %v1657
        %1676 = vmatpush.bf16.msra.mxu0 %v1655
        %1677 = vmatpush.bf16.msra.mxu0 %v1653
        %1678 = vmatpush.bf16.msra.mxu0 %v1651
        %1679 = vmatpush.bf16.msra.mxu0 %v1649
        %1680 = vmatmul.bf16.gmra.mxu0 %v1644
        %v1681 = vpop.f32.mrf.mxu0
        %v1682 = vadd.f32 0.0, %v1681
        %v1683 = vpop.f32.mrf.mxu0
        %v1684 = vadd.f32 0.0, %v1683
        %1685 = vmatmul.bf16.gmra.mxu0 %v1645
        %v1686 = vpop.f32.mrf.mxu0
        %v1687 = vadd.f32 0.0, %v1686
        %v1688 = vpop.f32.mrf.mxu0
        %v1689 = vadd.f32 0.0, %v1688
        %1690 = vmatmul.bf16.gmra.mxu0 %v1646
        %v1691 = vpop.f32.mrf.mxu0
        %v1692 = vadd.f32 0.0, %v1691
        %v1693 = vpop.f32.mrf.mxu0
        %v1694 = vadd.f32 0.0, %v1693
        %1695 = vmatmul.bf16.gmra.mxu0 %v1647
        %v1696 = vpop.f32.mrf.mxu0
        %v1697 = vadd.f32 0.0, %v1696
        %v1698 = vpop.f32.mrf.mxu0
        %v1699 = vadd.f32 0.0, %v1698
        %1700 = vdwg.mxu0
        %1702 = vset.pattern.permute.xlu0 1
        %1703 = vperm.xlu0 %1702, %v1525
        %v1704 = vpop.permute.xlu0 %1703
        %1707 = vset.pattern.permute.xlu0 1
        %1708 = vperm.xlu0 %1707, %v1527
        %v1709 = vpop.permute.xlu0 %1708
        %1712 = vset.pattern.permute.xlu0 1
        %1713 = vperm.xlu0 %1712, %v1529
        %v1714 = vpop.permute.xlu0 %1713
        %1717 = vset.pattern.permute.xlu0 1
        %1718 = vperm.xlu0 %1717, %v1531
        %v1719 = vpop.permute.xlu0 %1718
        %1722 = vset.pattern.permute.xlu0 1
        %1723 = vperm.xlu0 %1722, %v1533
        %v1724 = vpop.permute.xlu0 %1723
        %1727 = vset.pattern.permute.xlu0 1
        %1728 = vperm.xlu0 %1727, %v1535
        %v1729 = vpop.permute.xlu0 %1728
        %1732 = vset.pattern.permute.xlu0 1
        %1733 = vperm.xlu0 %1732, %v1537
        %v1734 = vpop.permute.xlu0 %1733
        %1737 = vset.pattern.permute.xlu0 1
        %1738 = vperm.xlu0 %1737, %v1539
        %v1739 = vpop.permute.xlu0 %1738
        %vm1741 = vcmask 7168
        %v1742 = vsel %vm1741, %v1162, %v1508
        %v1743 = vsel %vm1741, %v1163, %v1509
        %v1744 = vsel %vm1741, %v1164, %v1510
        %v1745 = vsel %vm1741, %v1165, %v1511
        %v1746 = vsel %vm1741, %v1166, %v1512
        %v1747 = vsel %vm1741, %v1167, %v1513
        %v1748 = vsel %vm1741, %v1168, %v1514
        %v1749 = vsel %vm1741, %v1169, %v1515
        %vm1750 = vcmask 15360
        %v1751 = vsel %vm1750, %v1742, -1e+30
        %v1752 = vsel %vm1750, %v1743, -1e+30
        %v1753 = vsel %vm1750, %v1744, -1e+30
        %v1754 = vsel %vm1750, %v1745, -1e+30
        %v1755 = vsel %vm1750, %v1746, -1e+30
        %v1756 = vsel %vm1750, %v1747, -1e+30
        %v1757 = vsel %vm1750, %v1748, -1e+30
        %v1758 = vsel %vm1750, %v1749, -1e+30
        %vm1759 = vcmask 64512
        %1760 = vst.msk [vmem:[#allocation3] sm:$0xff] %vm1759, %v1751
        %1761 = vst.msk [vmem:[#allocation3 + $0x8] sm:$0xff] %vm1759, %v1752
        %1762 = vst.msk [vmem:[#allocation3 + $0x10] sm:$0xff] %vm1759, %v1753
        %1763 = vst.msk [vmem:[#allocation3 + $0x18] sm:$0xff] %vm1759, %v1754
        %1764 = vst.msk [vmem:[#allocation3 + $0x20] sm:$0xff] %vm1759, %v1755
        %1765 = vst.msk [vmem:[#allocation3 + $0x28] sm:$0xff] %vm1759, %v1756
        %1766 = vst.msk [vmem:[#allocation3 + $0x30] sm:$0xff] %vm1759, %v1757
        %1767 = vst.msk [vmem:[#allocation3 + $0x38] sm:$0xff] %vm1759, %v1758
        %v1768 = vsel %vm1741, %v1290, %v1636
        %v1769 = vsel %vm1741, %v1291, %v1637
        %v1770 = vsel %vm1741, %v1292, %v1638
        %v1771 = vsel %vm1741, %v1293, %v1639
        %v1772 = vsel %vm1741, %v1294, %v1640
        %v1773 = vsel %vm1741, %v1295, %v1641
        %v1774 = vsel %vm1741, %v1296, %v1642
        %v1775 = vsel %vm1741, %v1297, %v1643
        %v1776 = vsel %vm1750, %v1768, 0.0
        %v1777 = vsel %vm1750, %v1769, 0.0
        %v1778 = vsel %vm1750, %v1770, 0.0
        %v1779 = vsel %vm1750, %v1771, 0.0
        %v1780 = vsel %vm1750, %v1772, 0.0
        %v1781 = vsel %vm1750, %v1773, 0.0
        %v1782 = vsel %vm1750, %v1774, 0.0
        %v1783 = vsel %vm1750, %v1775, 0.0
        %1784 = vst.msk [vmem:[#allocation4] sm:$0xff] %vm1759, %v1776
        %1785 = vst.msk [vmem:[#allocation4 + $0x8] sm:$0xff] %vm1759, %v1777
        %1786 = vst.msk [vmem:[#allocation4 + $0x10] sm:$0xff] %vm1759, %v1778
        %1787 = vst.msk [vmem:[#allocation4 + $0x18] sm:$0xff] %vm1759, %v1779
        %1788 = vst.msk [vmem:[#allocation4 + $0x20] sm:$0xff] %vm1759, %v1780
        %1789 = vst.msk [vmem:[#allocation4 + $0x28] sm:$0xff] %vm1759, %v1781
        %1790 = vst.msk [vmem:[#allocation4 + $0x30] sm:$0xff] %vm1759, %v1782
        %1791 = vst.msk [vmem:[#allocation4 + $0x38] sm:$0xff] %vm1759, %v1783
        %v1792 = vsel %vm1759, %v1382, %v1704
        %v1793 = vsel %vm1759, %v1387, %v1709
        %v1794 = vsel %vm1759, %v1392, %v1714
        %v1795 = vsel %vm1759, %v1397, %v1719
        %v1796 = vsel %vm1759, %v1402, %v1724
        %v1797 = vsel %vm1759, %v1407, %v1729
        %v1798 = vsel %vm1759, %v1412, %v1734
        %v1799 = vsel %vm1759, %v1417, %v1739
        %vm1800 = vcmask 130048
        %v1801 = vsel %vm1800, %v1792, 1.0
        %v1802 = vsel %vm1800, %v1793, 1.0
        %v1803 = vsel %vm1800, %v1794, 1.0
        %v1804 = vsel %vm1800, %v1795, 1.0
        %v1805 = vsel %vm1800, %v1796, 1.0
        %v1806 = vsel %vm1800, %v1797, 1.0
        %v1807 = vsel %vm1800, %v1798, 1.0
        %v1808 = vsel %vm1800, %v1799, 1.0
        %v1809 = vmul.f32 %v1801, %v1057
        %v1810 = vmul.f32 %v1802, %v1058
        %v1811 = vmul.f32 %v1803, %v1059
        %v1812 = vmul.f32 %v1804, %v1060
        %v1813 = vmul.f32 %v1805, %v1061
        %v1814 = vmul.f32 %v1806, %v1062
        %v1815 = vmul.f32 %v1807, %v1063
        %v1816 = vmul.f32 %v1808, %v1064
        %1825 = vrot.lane.b32.xlu0 %v1682, 8
        %v1826 = vpop.permute.xlu0 %1825
        %1827 = vrot.lane.b32.xlu0 %v1684, 8
        %v1828 = vpop.permute.xlu0 %1827
        %1829 = vrot.lane.b32.xlu0 %v1687, 8
        %v1830 = vpop.permute.xlu0 %1829
        %1831 = vrot.lane.b32.xlu0 %v1689, 8
        %v1832 = vpop.permute.xlu0 %1831
        %1833 = vrot.lane.b32.xlu0 %v1692, 8
        %v1834 = vpop.permute.xlu0 %1833
        %1835 = vrot.lane.b32.xlu0 %v1694, 8
        %v1836 = vpop.permute.xlu0 %1835
        %1837 = vrot.lane.b32.xlu0 %v1697, 8
        %v1838 = vpop.permute.xlu0 %1837
        %1839 = vrot.lane.b32.xlu0 %v1699, 8
        %v1840 = vpop.permute.xlu0 %1839
        %v1849 = vsel %vm1759, %v1360, %v1826
        %v1850 = vsel %vm1759, %v1362, %v1828
        %v1851 = vsel %vm1759, %v1365, %v1830
        %v1852 = vsel %vm1759, %v1367, %v1832
        %v1853 = vsel %vm1759, %v1370, %v1834
        %v1854 = vsel %vm1759, %v1372, %v1836
        %v1855 = vsel %vm1759, %v1375, %v1838
        %v1856 = vsel %vm1759, %v1377, %v1840
        %v1857 = vsel %vm1800, %v1849, 0.0
        %v1858 = vsel %vm1800, %v1850, 0.0
        %v1859 = vsel %vm1800, %v1851, 0.0
        %v1860 = vsel %vm1800, %v1852, 0.0
        %v1861 = vsel %vm1800, %v1853, 0.0
        %v1862 = vsel %vm1800, %v1854, 0.0
        %v1863 = vsel %vm1800, %v1855, 0.0
        %v1864 = vsel %vm1800, %v1856, 0.0
        %v1865 = vadd.f32 %v1809, %v1857
        %v1866 = vadd.f32 %v1810, %v1858
        %v1867 = vadd.f32 %v1811, %v1859
        %v1868 = vadd.f32 %v1812, %v1860
        %v1869 = vadd.f32 %v1813, %v1861
        %v1870 = vadd.f32 %v1814, %v1862
        %v1871 = vadd.f32 %v1815, %v1863
        %v1872 = vadd.f32 %v1816, %v1864
        %1873 = vst [vmem:[#allocation5] sm:$0xff] %v1865
        %1874 = vst [vmem:[#allocation5 + $0x8] sm:$0xff] %v1866
        %1875 = vst [vmem:[#allocation5 + $0x10] sm:$0xff] %v1867
        %1876 = vst [vmem:[#allocation5 + $0x18] sm:$0xff] %v1868
        %1877 = vst [vmem:[#allocation5 + $0x20] sm:$0xff] %v1869
        %1878 = vst [vmem:[#allocation5 + $0x28] sm:$0xff] %v1870
        %1879 = vst [vmem:[#allocation5 + $0x30] sm:$0xff] %v1871
        %1880 = vst [vmem:[#allocation5 + $0x38] sm:$0xff] %v1872
        %p1881 = scmp.eq.s32.totalorder %s31, 1
        // Predicated region
        $region106: #{tpu_custom_call.1} parent=88 // pred_check
          %p1882 = pneg %p1881
        $region107: #{tpu_custom_call.1} parent=88 // pred_check_branch
          %1884 = sbr.rel (%p1882) target = $region109
        $region108: #{tpu_custom_call.1} parent=88 // pred_region
          %v1885 = vld [vmem:[#allocation4] sm:$0xff]
          %v1886 = vld [vmem:[#allocation4 + $0x8] sm:$0xff]
          %v1887 = vld [vmem:[#allocation4 + $0x10] sm:$0xff]
          %v1888 = vld [vmem:[#allocation4 + $0x18] sm:$0xff]
          %v1889 = vld [vmem:[#allocation4 + $0x20] sm:$0xff]
          %v1890 = vld [vmem:[#allocation4 + $0x28] sm:$0xff]
          %v1891 = vld [vmem:[#allocation4 + $0x30] sm:$0xff]
          %v1892 = vld [vmem:[#allocation4 + $0x38] sm:$0xff]
          %vm1893 = vcmp.gt.f32.partialorder %v1885, 0.0
          %vm1894 = vcmp.gt.f32.partialorder %v1886, 0.0
          %vm1895 = vcmp.gt.f32.partialorder %v1887, 0.0
          %vm1896 = vcmp.gt.f32.partialorder %v1888, 0.0
          %vm1897 = vcmp.gt.f32.partialorder %v1889, 0.0
          %vm1898 = vcmp.gt.f32.partialorder %v1890, 0.0
          %vm1899 = vcmp.gt.f32.partialorder %v1891, 0.0
          %vm1900 = vcmp.gt.f32.partialorder %v1892, 0.0
          %v1901 = vsel %vm1893, %v1885, 1.0
          %v1902 = vsel %vm1894, %v1886, 1.0
          %v1903 = vsel %vm1895, %v1887, 1.0
          %v1904 = vsel %vm1896, %v1888, 1.0
          %v1905 = vsel %vm1897, %v1889, 1.0
          %v1906 = vsel %vm1898, %v1890, 1.0
          %v1907 = vsel %vm1899, %v1891, 1.0
          %v1908 = vsel %vm1900, %v1892, 1.0
          %v1909 = vrcp.pop %v1901
          %v1910 = vrcp.pop %v1902
          %v1911 = vrcp.pop %v1903
          %v1912 = vrcp.pop %v1904
          %v1913 = vrcp.pop %v1905
          %v1914 = vrcp.pop %v1906
          %v1915 = vrcp.pop %v1907
          %v1916 = vrcp.pop %v1908
          %1918 = vset.pattern.permute.xlu0 0
          %1919 = vperm.xlu0 %1918, %v1909
          %v1920 = vpop.permute.xlu0 %1919
          %1923 = vset.pattern.permute.xlu0 0
          %1924 = vperm.xlu0 %1923, %v1910
          %v1925 = vpop.permute.xlu0 %1924
          %1928 = vset.pattern.permute.xlu0 0
          %1929 = vperm.xlu0 %1928, %v1911
          %v1930 = vpop.permute.xlu0 %1929
          %1933 = vset.pattern.permute.xlu0 0
          %1934 = vperm.xlu0 %1933, %v1912
          %v1935 = vpop.permute.xlu0 %1934
          %1938 = vset.pattern.permute.xlu0 0
          %1939 = vperm.xlu0 %1938, %v1913
          %v1940 = vpop.permute.xlu0 %1939
          %1943 = vset.pattern.permute.xlu0 0
          %1944 = vperm.xlu0 %1943, %v1914
          %v1945 = vpop.permute.xlu0 %1944
          %1948 = vset.pattern.permute.xlu0 0
          %1949 = vperm.xlu0 %1948, %v1915
          %v1950 = vpop.permute.xlu0 %1949
          %1953 = vset.pattern.permute.xlu0 0
          %1954 = vperm.xlu0 %1953, %v1916
          %v1955 = vpop.permute.xlu0 %1954
          %1957 = vset.pattern.permute.xlu0 1
          %1958 = vperm.xlu0 %1957, %v1909
          %v1959 = vpop.permute.xlu0 %1958
          %1961 = vset.pattern.permute.xlu0 1
          %1962 = vperm.xlu0 %1961, %v1910
          %v1963 = vpop.permute.xlu0 %1962
          %1965 = vset.pattern.permute.xlu0 1
          %1966 = vperm.xlu0 %1965, %v1911
          %v1967 = vpop.permute.xlu0 %1966
          %1969 = vset.pattern.permute.xlu0 1
          %1970 = vperm.xlu0 %1969, %v1912
          %v1971 = vpop.permute.xlu0 %1970
          %1973 = vset.pattern.permute.xlu0 1
          %1974 = vperm.xlu0 %1973, %v1913
          %v1975 = vpop.permute.xlu0 %1974
          %1977 = vset.pattern.permute.xlu0 1
          %1978 = vperm.xlu0 %1977, %v1914
          %v1979 = vpop.permute.xlu0 %1978
          %1981 = vset.pattern.permute.xlu0 1
          %1982 = vperm.xlu0 %1981, %v1915
          %v1983 = vpop.permute.xlu0 %1982
          %1985 = vset.pattern.permute.xlu0 1
          %1986 = vperm.xlu0 %1985, %v1916
          %v1987 = vpop.permute.xlu0 %1986
          %v1989 = vld [vmem:[#allocation5] sm:$0xff]
          %v1990 = vld [vmem:[#allocation5 + $0x8] sm:$0xff]
          %v1991 = vld [vmem:[#allocation5 + $0x10] sm:$0xff]
          %v1992 = vld [vmem:[#allocation5 + $0x18] sm:$0xff]
          %v1993 = vld [vmem:[#allocation5 + $0x20] sm:$0xff]
          %v1994 = vld [vmem:[#allocation5 + $0x28] sm:$0xff]
          %v1995 = vld [vmem:[#allocation5 + $0x30] sm:$0xff]
          %v1996 = vld [vmem:[#allocation5 + $0x38] sm:$0xff]
          %v1997 = vsel %vm1759, %v1920, %v1959
          %v1998 = vsel %vm1759, %v1925, %v1963
          %v1999 = vsel %vm1759, %v1930, %v1967
          %v2000 = vsel %vm1759, %v1935, %v1971
          %v2001 = vsel %vm1759, %v1940, %v1975
          %v2002 = vsel %vm1759, %v1945, %v1979
          %v2003 = vsel %vm1759, %v1950, %v1983
          %v2004 = vsel %vm1759, %v1955, %v1987
          %v2005 = vsel %vm1800, %v1997, 1.0
          %v2006 = vsel %vm1800, %v1998, 1.0
          %v2007 = vsel %vm1800, %v1999, 1.0
          %v2008 = vsel %vm1800, %v2000, 1.0
          %v2009 = vsel %vm1800, %v2001, 1.0
          %v2010 = vsel %vm1800, %v2002, 1.0
          %v2011 = vsel %vm1800, %v2003, 1.0
          %v2012 = vsel %vm1800, %v2004, 1.0
          %v2013 = vmul.f32 %v1989, %v2005
          %v2014 = vmul.f32 %v1990, %v2006
          %v2015 = vmul.f32 %v1991, %v2007
          %v2016 = vmul.f32 %v1992, %v2008
          %v2017 = vmul.f32 %v1993, %v2009
          %v2018 = vmul.f32 %v1994, %v2010
          %v2019 = vmul.f32 %v1995, %v2011
          %v2020 = vmul.f32 %v1996, %v2012
          %v2021 = vld [vmem:[%s5] sm:$0x1]
          %v2023 = vperm.slane %v2021, 0
          %v2025 = vmul.f32 %v2013, %v2023
          %v2026 = vmul.f32 %v2014, %v2023
          %v2027 = vmul.f32 %v2015, %v2023
          %v2028 = vmul.f32 %v2016, %v2023
          %v2029 = vmul.f32 %v2017, %v2023
          %v2030 = vmul.f32 %v2018, %v2023
          %v2031 = vmul.f32 %v2019, %v2023
          %v2032 = vmul.f32 %v2020, %v2023
          %v2033 = vld [vmem:[%s6] sm:$0x1]
          %v2035 = vperm.slane %v2033, 0
          %v2037 = vadd.f32 %v2025, %v2035
          %v2038 = vadd.f32 %v2026, %v2035
          %v2039 = vadd.f32 %v2027, %v2035
          %v2040 = vadd.f32 %v2028, %v2035
          %v2041 = vadd.f32 %v2029, %v2035
          %v2042 = vadd.f32 %v2030, %v2035
          %v2043 = vadd.f32 %v2031, %v2035
          %v2044 = vadd.f32 %v2032, %v2035
          %vm2045 = vcmp.gt.f32.partialorder %v2037, 0.0
          %vm2046 = vcmp.gt.f32.partialorder %v2038, 0.0
          %vm2047 = vcmp.gt.f32.partialorder %v2039, 0.0
          %vm2048 = vcmp.gt.f32.partialorder %v2040, 0.0
          %vm2049 = vcmp.gt.f32.partialorder %v2041, 0.0
          %vm2050 = vcmp.gt.f32.partialorder %v2042, 0.0
          %vm2051 = vcmp.gt.f32.partialorder %v2043, 0.0
          %vm2052 = vcmp.gt.f32.partialorder %v2044, 0.0
          %v2053 = vmul.f32 %v2037, 1.442695
          %v2054 = vpow.pop %v2053
          %v2055 = vmul.f32 %v2038, 1.442695
          %v2056 = vpow.pop %v2055
          %v2057 = vmul.f32 %v2039, 1.442695
          %v2058 = vpow.pop %v2057
          %v2059 = vmul.f32 %v2040, 1.442695
          %v2060 = vpow.pop %v2059
          %v2061 = vmul.f32 %v2041, 1.442695
          %v2062 = vpow.pop %v2061
          %v2063 = vmul.f32 %v2042, 1.442695
          %v2064 = vpow.pop %v2063
          %v2065 = vmul.f32 %v2043, 1.442695
          %v2066 = vpow.pop %v2065
          %v2067 = vmul.f32 %v2044, 1.442695
          %v2068 = vpow.pop %v2067
          %v2069 = vsub.f32 %v2054, 1.0
          %v2070 = vsub.f32 %v2056, 1.0
          %v2071 = vsub.f32 %v2058, 1.0
          %v2072 = vsub.f32 %v2060, 1.0
          %v2073 = vsub.f32 %v2062, 1.0
          %v2074 = vsub.f32 %v2064, 1.0
          %v2075 = vsub.f32 %v2066, 1.0
          %v2076 = vsub.f32 %v2068, 1.0
          %v2077 = vsel %vm2045, %v2037, %v2069
          %v2078 = vsel %vm2046, %v2038, %v2070
          %v2079 = vsel %vm2047, %v2039, %v2071
          %v2080 = vsel %vm2048, %v2040, %v2072
          %v2081 = vsel %vm2049, %v2041, %v2073
          %v2082 = vsel %vm2050, %v2042, %v2074
          %v2083 = vsel %vm2051, %v2043, %v2075
          %v2084 = vsel %vm2052, %v2044, %v2076
          %2085 = vst [vmem:[%s466] sm:$0xff] %v2077
          %2086 = vst [vmem:[%s466 + $0x8] sm:$0xff] %v2078
          %2087 = vst [vmem:[%s466 + $0x10] sm:$0xff] %v2079
          %2088 = vst [vmem:[%s466 + $0x18] sm:$0xff] %v2080
          %2089 = vst [vmem:[%s466 + $0x20] sm:$0xff] %v2081
          %2090 = vst [vmem:[%s466 + $0x28] sm:$0xff] %v2082
          %2091 = vst [vmem:[%s466 + $0x30] sm:$0xff] %v2083
          %2092 = vst [vmem:[%s466 + $0x38] sm:$0xff] %v2084
        $region109: #{tpu_custom_call.1} parent=88 // pred_fallthru
          _
        %s2093 = sand.u32 %s231, 1
        %s2094 = scalar_lea.sflag [#allocation8], %s2093
        %s2095 = sand.u32 %s231, 1
        %s2096 = smul.addr %s2095, 64
        %s2097 = scalar_lea.vmem [#allocation12], %s2096
        // Predicated region
        $region110: #{tpu_custom_call.1} parent=88 // pred_check
          %p2098 = pneg %p241
        $region111: #{tpu_custom_call.1} parent=88 // pred_check_branch
          %2100 = sbr.rel (%p2098) target = $region113
        $region112: #{tpu_custom_call.1} parent=88 // pred_region
          %s2101 = smul.u32 8, %s30
          %2103 = vsyncadd %s2094, 0
          %s2104 = smul.addr %s2101, 8
          %s2105 = scalar_lea.hbm %s8, %s2104
          %s2106 = sshll.u32 %s2097, 4
          %s2107 = int_to_ptr.vmem [resolvable:$true] %s2106
          %s2108 = sshll.u32 %s2105, 4
          %s2109 = int_to_ptr.hbm [resolvable:$true] %s2108
          %2114 = dma.vmem_to_hbm [thread:$0]  %s2107, 1024, %s2109, %s2094, 128, 128, 8
        $region113: #{tpu_custom_call.1} parent=88 // pred_fallthru
          _
      $region89: #{tpu_custom_call.1} parent=5 // pred_fallthru
        _
      %p2115 = scmp.le.s32.totalorder 2, %s21
      // Predicated region
      $region114: #{tpu_custom_call.1} parent=5 // pred_check
        %p2116 = pneg %p2115
      $region115: #{tpu_custom_call.1} parent=5 // pred_check_branch
        %2118 = sbr.rel (%p2116) target = $region117
      $region116: #{tpu_custom_call.1} parent=5 // pred_region
        %s2119 = ssub.s32 %s21, 2
        // Predicated region
        $region118: #{tpu_custom_call.1} parent=116 // pred_check
          %p2120 = pneg %p247
        $region119: #{tpu_custom_call.1} parent=116 // pred_check_branch
          %2122 = sbr.rel (%p2120) target = $region121
        $region120: #{tpu_custom_call.1} parent=116 // pred_region
          %s2123 = sand.u32 %s232, 1
          %s2124 = scalar_lea.sflag [#allocation8], %s2123
          %s2125 = sand.u32 %s232, 1
          %s2126 = smul.addr %s2125, 64
          %s2127 = scalar_lea.vmem [#allocation12], %s2126
          %2129 = dma.done %s2124, 1024
        $region121: #{tpu_custom_call.1} parent=116 // pred_fallthru
          _
      $region117: #{tpu_custom_call.1} parent=5 // pred_fallthru
        _
    $region6: #{tpu_custom_call.1} parent=1 // loop_footer
      %s25 = sadd.s32 1, %s21
    $region7: #{tpu_custom_call.1} parent=1 // loop_footer_branch
      %20 = sbr.rel target = $region3
    $region8: #{tpu_custom_call.1} parent=1 // loop_exit
      _
    %2130 = vsyncpa [#allocation7], 1
    %s2131 = scalar_lea.sflag [#allocation7], 1
    %2132 = vsyncpa %s2131, 1
    %2133 = vsyncpa [#allocation10], 1
    %2134 = vsyncpa [#allocation8], 1
    %s2135 = scalar_lea.sflag [#allocation8], 1
    %2136 = vsyncpa %s2135, 1

</llo_original>
